<compile_context>
chip_gen: v6e
topology: v6e:2x2x1
jax: 0.10.0
libtpu: 0.0.40
codegen_flags: <defaults>
</compile_context>

<pallas_src>
import jax
import jax.numpy as jnp
from jax.experimental import pallas as pl
from jax.experimental.pallas import tpu as pltpu

# Logical (PyTorch) dims and their 128-lane padded counterparts.
D_IN, D1, D2, D3, D_OUT = 77, 200, 400, 600, 400
P_IN, P1, P2, P3, P_OUT = 128, 256, 512, 640, 512


def _round_up(n, m):
    return ((n + m - 1) // m) * m


def mlp_kernel(x_ref, w1_ref, b1_ref, w2_ref, b2_ref,
               w3_ref, b3_ref, w4_ref, b4_ref, o_ref):
    # Activations stay f32; matmul inputs cast to bf16 (weights already bf16),
    # accumulation in f32 on the MXU.
    h = x_ref[...]

    # fc1 + ReLU  (dropout = identity at inference)
    h = jnp.dot(h.astype(jnp.bfloat16), w1_ref[...],
                preferred_element_type=jnp.float32) + b1_ref[...]
    h = jnp.maximum(h, 0.0)

    # fc2 + ReLU
    h = jnp.dot(h.astype(jnp.bfloat16), w2_ref[...],
                preferred_element_type=jnp.float32) + b2_ref[...]
    h = jnp.maximum(h, 0.0)

    # fc3 + ReLU  (dropout = identity at inference)
    h = jnp.dot(h.astype(jnp.bfloat16), w3_ref[...],
                preferred_element_type=jnp.float32) + b3_ref[...]
    h = jnp.maximum(h, 0.0)

    # fc4 + ReLU
    h = jnp.dot(h.astype(jnp.bfloat16), w4_ref[...],
                preferred_element_type=jnp.float32) + b4_ref[...]
    h = jnp.maximum(h, 0.0)

    o_ref[...] = h.astype(o_ref.dtype)


def _pad_weight(w, pi, po):
    """Zero-pad (in, out) weight to (pi, po) and cast to bf16."""
    wp = jnp.zeros((pi, po), jnp.float32).at[:w.shape[0], :w.shape[1]].set(w)
    return wp.astype(jnp.bfloat16)


def _pad_bias(b, po):
    """Zero-pad (1, out) bias to (1, po), keep f32."""
    return jnp.zeros((1, po), jnp.float32).at[:, :b.shape[1]].set(b)


def neural_network_forward(x, params):
    """x: (B, 77) f32, params: (w1,b1,...,w4,b4) with w in (in, out) layout."""
    w1, b1, w2, b2, w3, b3, w4, b4 = params
    B = x.shape[0]

    # Batch tiling: pipeline activation tiles; weights stay resident.
    tile_b = min(256, _round_up(B, 8))
    b_pad = _round_up(B, tile_b)

    # Host-side padding (zeros -> bit-identical result on the real columns).
    xp = jnp.zeros((b_pad, P_IN), jnp.float32).at[:B, :D_IN].set(x)
    w1p, b1p = _pad_weight(w1, P_IN, P1), _pad_bias(b1, P1)
    w2p, b2p = _pad_weight(w2, P1, P2), _pad_bias(b2, P2)
    w3p, b3p = _pad_weight(w3, P2, P3), _pad_bias(b3, P3)
    w4p, b4p = _pad_weight(w4, P3, P_OUT), _pad_bias(b4, P_OUT)

    def resident(shape):
        # Constant block index -> loaded once, stays in VMEM across the grid.
        return pl.BlockSpec(shape, lambda i: (0, 0))

    out_padded = pl.pallas_call(
        mlp_kernel,
        out_shape=jax.ShapeDtypeStruct((b_pad, P_OUT), jnp.float32),
        grid_spec=pltpu.PrefetchScalarGridSpec(
            num_scalar_prefetch=0,
            grid=(b_pad // tile_b,),
            in_specs=[
                pl.BlockSpec((tile_b, P_IN), lambda i: (i, 0)),   # x tile
                resident((P_IN, P1)), resident((1, P1)),          # fc1
                resident((P1, P2)),   resident((1, P2)),          # fc2
                resident((P2, P3)),   resident((1, P3)),          # fc3
                resident((P3, P_OUT)), resident((1, P_OUT)),      # fc4
            ],
            out_specs=pl.BlockSpec((tile_b, P_OUT), lambda i: (i, 0)),
        ),
        compiler_params=pltpu.CompilerParams(
            dimension_semantics=("parallel",),
        ),
    )(xp, w1p, b1p, w2p, b2p, w3p, b3p, w4p, b4p)

    # Strip batch / lane padding.
    return out_padded[:B, :D_OUT]


def init_params(key):
    """Deterministic init mimicking nn.Linear default (U[-1/sqrt(fan_in), +])."""
    dims = [(D_IN, D1), (D1, D2), (D2, D3), (D3, D_OUT)]
    params = []
    for i, (fan_in, fan_out) in enumerate(dims):
        kw, kb = jax.random.split(jax.random.fold_in(key, i))
        bound = 1.0 / jnp.sqrt(float(fan_in))
        w = jax.random.uniform(kw, (fan_in, fan_out), jnp.float32, -bound, bound)
        b = jax.random.uniform(kb, (1, fan_out), jnp.float32, -bound, bound)
        params += [w, b]
    return tuple(params)


if __name__ == "__main__":
    key = jax.random.PRNGKey(0)
    k_x, k_p = jax.random.split(key)

    B = 8
    x = jax.random.normal(k_x, (B, D_IN), jnp.float32)
    params = init_params(k_p)

    out = neural_network_forward(x, params)
    out = jax.block_until_ready(out)

    assert out.shape == (B, D_OUT), out.shape
    assert out.dtype == jnp.float32
    assert bool(jnp.all(out >= 0.0))  # final ReLU

    # Cross-check against a plain-JAX reference (bf16 weights, f32 accum).
    w1, b1, w2, b2, w3, b3, w4, b4 = params
    def ref(x):
        h = jnp.maximum(jnp.dot(x.astype(jnp.bfloat16), w1.astype(jnp.bfloat16),
                                preferred_element_type=jnp.float32) + b1, 0.0)
        h = jnp.maximum(jnp.dot(h.astype(jnp.bfloat16), w2.astype(jnp.bfloat16),
                                preferred_element_type=jnp.float32) + b2, 0.0)
        h = jnp.maximum(jnp.dot(h.astype(jnp.bfloat16), w3.astype(jnp.bfloat16),
                                preferred_element_type=jnp.float32) + b3, 0.0)
        h = jnp.maximum(jnp.dot(h.astype(jnp.bfloat16), w4.astype(jnp.bfloat16),
                                preferred_element_type=jnp.float32) + b4, 0.0)
        return h
    ref_out = jax.block_until_ready(ref(x))
    assert bool(jnp.allclose(out, ref_out, rtol=2e-2, atol=2e-2))

    print("KERNEL_OK")
</pallas_src>

<mosaic_0001>
module attributes {stable_mosaic.version = 11 : i64} {
  func.func @mlp_kernel(%arg0: i32, %arg1: memref<8x128xf32, #tpu.memory_space<vmem>>, %arg2: memref<128x256xbf16, #tpu.memory_space<vmem>>, %arg3: memref<1x256xf32, #tpu.memory_space<vmem>>, %arg4: memref<256x512xbf16, #tpu.memory_space<vmem>>, %arg5: memref<1x512xf32, #tpu.memory_space<vmem>>, %arg6: memref<512x640xbf16, #tpu.memory_space<vmem>>, %arg7: memref<1x640xf32, #tpu.memory_space<vmem>>, %arg8: memref<640x512xbf16, #tpu.memory_space<vmem>>, %arg9: memref<1x512xf32, #tpu.memory_space<vmem>>, %arg10: memref<8x512xf32, #tpu.memory_space<vmem>>) attributes {dimension_semantics = [#tpu.dimension_semantics<parallel>], iteration_bounds = array<i64: 1>, scalar_prefetch = 0 : i64, scratch_operands = 0 : i64, tpu.core_type = #tpu.core_type<tc>, window_params = [{transform_indices = @transform_0, window_bounds = array<i64: 8, 128>}, {pipeline_mode = #tpu.pipeline_mode<synchronous>, transform_indices = @transform_1, window_bounds = array<i64: 128, 256>}, {pipeline_mode = #tpu.pipeline_mode<synchronous>, transform_indices = @transform_2, window_bounds = array<i64: 1, 256>}, {pipeline_mode = #tpu.pipeline_mode<synchronous>, transform_indices = @transform_3, window_bounds = array<i64: 256, 512>}, {pipeline_mode = #tpu.pipeline_mode<synchronous>, transform_indices = @transform_4, window_bounds = array<i64: 1, 512>}, {pipeline_mode = #tpu.pipeline_mode<synchronous>, transform_indices = @transform_5, window_bounds = array<i64: 512, 640>}, {pipeline_mode = #tpu.pipeline_mode<synchronous>, transform_indices = @transform_6, window_bounds = array<i64: 1, 640>}, {pipeline_mode = #tpu.pipeline_mode<synchronous>, transform_indices = @transform_7, window_bounds = array<i64: 640, 512>}, {pipeline_mode = #tpu.pipeline_mode<synchronous>, transform_indices = @transform_8, window_bounds = array<i64: 1, 512>}, {transform_indices = @transform_9, window_bounds = array<i64: 8, 512>}]} {
    %c0 = arith.constant 0 : index
    %c0_0 = arith.constant 0 : index
    %0 = vector.load %arg1[%c0, %c0_0] : memref<8x128xf32, #tpu.memory_space<vmem>>, vector<8x128xf32>
    %1 = arith.truncf %0 : vector<8x128xf32> to vector<8x128xbf16>
    %c0_1 = arith.constant 0 : index
    %c0_2 = arith.constant 0 : index
    %2 = vector.load %arg2[%c0_1, %c0_2] : memref<128x256xbf16, #tpu.memory_space<vmem>>, vector<128x256xbf16>
    %cst = arith.constant dense<0.000000e+00> : vector<8x256xf32>
    %3 = tpu.matmul %1, %2, %cst {dimension_numbers = #tpu.dot_dimension_numbers<[1], [0], [0], [1], [0, 0, 1, 1], [], []>} : vector<8x128xbf16>, vector<128x256xbf16>, vector<8x256xf32> -> vector<8x256xf32>
    %c0_3 = arith.constant 0 : index
    %c0_4 = arith.constant 0 : index
    %4 = vector.load %arg3[%c0_3, %c0_4] : memref<1x256xf32, #tpu.memory_space<vmem>>, vector<1x256xf32>
    %5 = vector.broadcast %4 : vector<1x256xf32> to vector<8x256xf32>
    %6 = arith.addf %3, %5 : vector<8x256xf32>
    %cst_5 = arith.constant 0.000000e+00 : f32
    %7 = vector.broadcast %cst_5 : f32 to vector<8x256xf32>
    %8 = arith.maximumf %6, %7 : vector<8x256xf32>
    %9 = arith.truncf %8 : vector<8x256xf32> to vector<8x256xbf16>
    %c0_6 = arith.constant 0 : index
    %c0_7 = arith.constant 0 : index
    %10 = vector.load %arg4[%c0_6, %c0_7] : memref<256x512xbf16, #tpu.memory_space<vmem>>, vector<256x512xbf16>
    %cst_8 = arith.constant dense<0.000000e+00> : vector<8x512xf32>
    %11 = tpu.matmul %9, %10, %cst_8 {dimension_numbers = #tpu.dot_dimension_numbers<[1], [0], [0], [1], [0, 0, 1, 1], [], []>} : vector<8x256xbf16>, vector<256x512xbf16>, vector<8x512xf32> -> vector<8x512xf32>
    %c0_9 = arith.constant 0 : index
    %c0_10 = arith.constant 0 : index
    %12 = vector.load %arg5[%c0_9, %c0_10] : memref<1x512xf32, #tpu.memory_space<vmem>>, vector<1x512xf32>
    %13 = vector.broadcast %12 : vector<1x512xf32> to vector<8x512xf32>
    %14 = arith.addf %11, %13 : vector<8x512xf32>
    %cst_11 = arith.constant 0.000000e+00 : f32
    %15 = vector.broadcast %cst_11 : f32 to vector<8x512xf32>
    %16 = arith.maximumf %14, %15 : vector<8x512xf32>
    %17 = arith.truncf %16 : vector<8x512xf32> to vector<8x512xbf16>
    %c0_12 = arith.constant 0 : index
    %c0_13 = arith.constant 0 : index
    %18 = vector.load %arg6[%c0_12, %c0_13] : memref<512x640xbf16, #tpu.memory_space<vmem>>, vector<512x640xbf16>
    %cst_14 = arith.constant dense<0.000000e+00> : vector<8x640xf32>
    %19 = tpu.matmul %17, %18, %cst_14 {dimension_numbers = #tpu.dot_dimension_numbers<[1], [0], [0], [1], [0, 0, 1, 1], [], []>} : vector<8x512xbf16>, vector<512x640xbf16>, vector<8x640xf32> -> vector<8x640xf32>
    %c0_15 = arith.constant 0 : index
    %c0_16 = arith.constant 0 : index
    %20 = vector.load %arg7[%c0_15, %c0_16] : memref<1x640xf32, #tpu.memory_space<vmem>>, vector<1x640xf32>
    %21 = vector.broadcast %20 : vector<1x640xf32> to vector<8x640xf32>
    %22 = arith.addf %19, %21 : vector<8x640xf32>
    %cst_17 = arith.constant 0.000000e+00 : f32
    %23 = vector.broadcast %cst_17 : f32 to vector<8x640xf32>
    %24 = arith.maximumf %22, %23 : vector<8x640xf32>
    %25 = arith.truncf %24 : vector<8x640xf32> to vector<8x640xbf16>
    %c0_18 = arith.constant 0 : index
    %c0_19 = arith.constant 0 : index
    %26 = vector.load %arg8[%c0_18, %c0_19] : memref<640x512xbf16, #tpu.memory_space<vmem>>, vector<640x512xbf16>
    %cst_20 = arith.constant dense<0.000000e+00> : vector<8x512xf32>
    %27 = tpu.matmul %25, %26, %cst_20 {dimension_numbers = #tpu.dot_dimension_numbers<[1], [0], [0], [1], [0, 0, 1, 1], [], []>} : vector<8x640xbf16>, vector<640x512xbf16>, vector<8x512xf32> -> vector<8x512xf32>
    %c0_21 = arith.constant 0 : index
    %c0_22 = arith.constant 0 : index
    %28 = vector.load %arg9[%c0_21, %c0_22] : memref<1x512xf32, #tpu.memory_space<vmem>>, vector<1x512xf32>
    %29 = vector.broadcast %28 : vector<1x512xf32> to vector<8x512xf32>
    %30 = arith.addf %27, %29 : vector<8x512xf32>
    %cst_23 = arith.constant 0.000000e+00 : f32
    %31 = vector.broadcast %cst_23 : f32 to vector<8x512xf32>
    %32 = arith.maximumf %30, %31 : vector<8x512xf32>
    %c0_24 = arith.constant 0 : index
    %c0_25 = arith.constant 0 : index
    %33 = vector.load %arg10[%c0_24, %c0_25] : memref<8x512xf32, #tpu.memory_space<vmem>>, vector<8x512xf32>
    tpu.vector_store %arg10[%c0_24, %c0_25], %32 {strides = array<i32>} : memref<8x512xf32, #tpu.memory_space<vmem>>, vector<8x512xf32>,
    return
  }
  func.func @transform_0(%arg0: i32) -> (i32, i32) {
    %c0_i32 = arith.constant 0 : i32
    %c0_i32_0 = arith.constant 0 : i32
    return %arg0, %c0_i32 : i32, i32
  }
  func.func @transform_1(%arg0: i32) -> (i32, i32) {
    %c0_i32 = arith.constant 0 : i32
    %c0_i32_0 = arith.constant 0 : i32
    %c0_i32_1 = arith.constant 0 : i32
    return %c0_i32, %c0_i32_0 : i32, i32
  }
  func.func @transform_2(%arg0: i32) -> (i32, i32) {
    %c0_i32 = arith.constant 0 : i32
    %c0_i32_0 = arith.constant 0 : i32
    %c0_i32_1 = arith.constant 0 : i32
    return %c0_i32, %c0_i32_0 : i32, i32
  }
  func.func @transform_3(%arg0: i32) -> (i32, i32) {
    %c0_i32 = arith.constant 0 : i32
    %c0_i32_0 = arith.constant 0 : i32
    %c0_i32_1 = arith.constant 0 : i32
    return %c0_i32, %c0_i32_0 : i32, i32
  }
  func.func @transform_4(%arg0: i32) -> (i32, i32) {
    %c0_i32 = arith.constant 0 : i32
    %c0_i32_0 = arith.constant 0 : i32
    %c0_i32_1 = arith.constant 0 : i32
    return %c0_i32, %c0_i32_0 : i32, i32
  }
  func.func @transform_5(%arg0: i32) -> (i32, i32) {
    %c0_i32 = arith.constant 0 : i32
    %c0_i32_0 = arith.constant 0 : i32
    %c0_i32_1 = arith.constant 0 : i32
    return %c0_i32, %c0_i32_0 : i32, i32
  }
  func.func @transform_6(%arg0: i32) -> (i32, i32) {
    %c0_i32 = arith.constant 0 : i32
    %c0_i32_0 = arith.constant 0 : i32
    %c0_i32_1 = arith.constant 0 : i32
    return %c0_i32, %c0_i32_0 : i32, i32
  }
  func.func @transform_7(%arg0: i32) -> (i32, i32) {
    %c0_i32 = arith.constant 0 : i32
    %c0_i32_0 = arith.constant 0 : i32
    %c0_i32_1 = arith.constant 0 : i32
    return %c0_i32, %c0_i32_0 : i32, i32
  }
  func.func @transform_8(%arg0: i32) -> (i32, i32) {
    %c0_i32 = arith.constant 0 : i32
    %c0_i32_0 = arith.constant 0 : i32
    %c0_i32_1 = arith.constant 0 : i32
    return %c0_i32, %c0_i32_0 : i32, i32
  }
  func.func @transform_9(%arg0: i32) -> (i32, i32) {
    %c0_i32 = arith.constant 0 : i32
    %c0_i32_0 = arith.constant 0 : i32
    return %arg0, %c0_i32 : i32, i32
  }
}

</mosaic_0001>

<llo_original>
// kernel: tpu_custom_call.1
$region0: #{tpu_custom_call.1}
  #allocation0 [shape = 'u32[]', space=smem, size = 0x4, offset = 0x4, fixed_abs, tag = 'smem constant byte address 0x4 - core index']
  #allocation1 [shape = 'u32[144,128]{1,0:T(1,128)}', space=vmem, size = 0x12000, scoped, tag = 'internal scratch']
  %s0 = inlined_call_operand.hbm [shape: f32[8,128], index: 0, kind: input, shape index: {}]
  %s1 = inlined_call_operand.hbm [shape: bf16[128,256], index: 1, kind: input, shape index: {}]
  %s2 = inlined_call_operand.hbm [shape: f32[1,256], index: 2, kind: input, shape index: {}]
  %s3 = inlined_call_operand.hbm [shape: bf16[256,512], index: 3, kind: input, shape index: {}]
  %s4 = inlined_call_operand.vmem [shape: f32[1,512], index: 4, kind: input, shape index: {}]
  %s5 = inlined_call_operand.hbm [shape: bf16[512,640], index: 5, kind: input, shape index: {}]
  %s6 = inlined_call_operand.vmem [shape: f32[1,640], index: 6, kind: input, shape index: {}]
  %s7 = inlined_call_operand.hbm [shape: bf16[640,512], index: 7, kind: input, shape index: {}]
  %s8 = inlined_call_operand.vmem [shape: f32[1,512], index: 8, kind: input, shape index: {}]
  %s9 = inlined_call_operand.hbm [shape: f32[8,512], index: 9, kind: output, shape index: {}]
  %s10 = sld [smem:[#allocation0]]
  $region70: #{tpu_custom_call.1} parent=0
    _
  %s12 = ssub.s32 1, %s10
  %s13 = scalar_select 0, %s12, %s10
  $region1: #{tpu_custom_call.1} parent=0
    #allocation2 [shape = 'u8[4096]{0}', space=vmem, size = 0x1000, scoped, tag = 'input window, operand 0, single buffered']
    #allocation3 [shape = 's32[1]{0}', space=sflag, size = 0x4, scoped, tag = 'scoped memory for tpu_custom_call.1']
    #allocation4 [shape = 's32[1]{0}', space=sflag, size = 0x4, scoped, tag = 'scoped memory for tpu_custom_call.1']
    #allocation5 [shape = 'u8[65536]{0}', space=vmem, size = 0x10000, scoped, tag = 'input window, operand 1, single buffered']
    #allocation6 [shape = 's32[1]{0}', space=sflag, size = 0x4, scoped, tag = 'scoped memory for tpu_custom_call.1']
    #allocation7 [shape = 'u8[1024]{0}', space=vmem, size = 0x400, scoped, tag = 'input window, operand 2, single buffered']
    #allocation8 [shape = 'u8[262144]{0}', space=vmem, size = 0x40000, scoped, tag = 'input window, operand 3, single buffered']
    #allocation9 [shape = 's32[1]{0}', space=sflag, size = 0x4, scoped, tag = 'scoped memory for tpu_custom_call.1']
    #allocation10 [shape = 'u8[655360]{0}', space=vmem, size = 0xa0000, scoped, tag = 'input window, operand 5, single buffered']
    #allocation11 [shape = 'u8[655360]{0}', space=vmem, size = 0xa0000, scoped, tag = 'input window, operand 7, single buffered']
    #allocation12 [shape = 's32[1]{0}', space=sflag, size = 0x4, scoped, tag = 'scoped memory for tpu_custom_call.1']
    #allocation13 [shape = 'u8[16384]{0}', space=vmem, size = 0x4000, scoped, tag = 'output window, operand 0, single buffered']
    %14 = vsyncpa [#allocation3], 0
    %15 = vsyncpa [#allocation6], 0
    %16 = vsyncpa [#allocation9], 0
    %17 = vsyncpa [#allocation12], 0
    %18 = vsyncpa [#allocation4], 0
    // Predicated region
    $region2: #{tpu_custom_call.1} parent=1 // pred_check
      _
    $region3: #{tpu_custom_call.1} parent=1 // pred_check_branch
      %20 = sbr.rel (0) target = $region5
    $region4: #{tpu_custom_call.1} parent=1 // pred_region
      %s22 = ssub.s32 128, 128
      %23 = vsyncadd [#allocation3], %s22
      %s25 = sshll.u32 [#allocation2], 4
      %s26 = int_to_ptr.vmem [resolvable:$true] %s25
      %28 = dma.hbm_to_vmem [thread:$0]  %s0, 128, %s26, [#allocation3]
    $region5: #{tpu_custom_call.1} parent=1 // pred_fallthru
      _
    // Predicated region
    $region6: #{tpu_custom_call.1} parent=1 // pred_check
      _
    $region7: #{tpu_custom_call.1} parent=1 // pred_check_branch
      %30 = sbr.rel (0) target = $region9
    $region8: #{tpu_custom_call.1} parent=1 // pred_region
      %s32 = ssub.s32 2048, 2048
      %33 = vsyncadd [#allocation6], %s32
      %s34 = sshll.u32 [#allocation5], 4
      %s35 = int_to_ptr.vmem [resolvable:$true] %s34
      %40 = dma.hbm_to_vmem [thread:$0]  %s1, 2048, %s35, [#allocation6], 128, 128, 8
    $region9: #{tpu_custom_call.1} parent=1 // pred_fallthru
      _
    // Predicated region
    $region10: #{tpu_custom_call.1} parent=1 // pred_check
      _
    $region11: #{tpu_custom_call.1} parent=1 // pred_check_branch
      %42 = sbr.rel (0) target = $region13
    $region12: #{tpu_custom_call.1} parent=1 // pred_region
      %s44 = ssub.s32 32, 32
      %45 = vsyncadd [#allocation6], %s44
      %s47 = sshll.u32 [#allocation7], 4
      %s48 = int_to_ptr.vmem [resolvable:$true] %s47
      %50 = dma.hbm_to_vmem [thread:$0]  %s2, 32, %s48, [#allocation6]
    $region13: #{tpu_custom_call.1} parent=1 // pred_fallthru
      _
    // Predicated region
    $region14: #{tpu_custom_call.1} parent=1 // pred_check
      _
    $region15: #{tpu_custom_call.1} parent=1 // pred_check_branch
      %52 = sbr.rel (0) target = $region17
    $region16: #{tpu_custom_call.1} parent=1 // pred_region
      %s54 = ssub.s32 8192, 8192
      %55 = vsyncadd [#allocation9], %s54
      %s56 = sshll.u32 [#allocation8], 4
      %s57 = int_to_ptr.vmem [resolvable:$true] %s56
      %62 = dma.hbm_to_vmem [thread:$0]  %s3, 8192, %s57, [#allocation9], 256, 256, 16
    $region17: #{tpu_custom_call.1} parent=1 // pred_fallthru
      _
    // Predicated region
    $region18: #{tpu_custom_call.1} parent=1 // pred_check
      _
    $region19: #{tpu_custom_call.1} parent=1 // pred_check_branch
      %64 = sbr.rel (0) target = $region21
    $region20: #{tpu_custom_call.1} parent=1 // pred_region
      _
    $region21: #{tpu_custom_call.1} parent=1 // pred_fallthru
      _
    // Predicated region
    $region22: #{tpu_custom_call.1} parent=1 // pred_check
      _
    $region23: #{tpu_custom_call.1} parent=1 // pred_check_branch
      %66 = sbr.rel (0) target = $region25
    $region24: #{tpu_custom_call.1} parent=1 // pred_region
      %s68 = ssub.s32 20480, 20480
      %69 = vsyncadd [#allocation9], %s68
      %s70 = sshll.u32 [#allocation10], 4
      %s71 = int_to_ptr.vmem [resolvable:$true] %s70
      %76 = dma.hbm_to_vmem [thread:$0]  %s5, 20480, %s71, [#allocation9], 320, 320, 20
    $region25: #{tpu_custom_call.1} parent=1 // pred_fallthru
      _
    // Predicated region
    $region26: #{tpu_custom_call.1} parent=1 // pred_check
      _
    $region27: #{tpu_custom_call.1} parent=1 // pred_check_branch
      %78 = sbr.rel (0) target = $region29
    $region28: #{tpu_custom_call.1} parent=1 // pred_region
      _
    $region29: #{tpu_custom_call.1} parent=1 // pred_fallthru
      _
    // Predicated region
    $region30: #{tpu_custom_call.1} parent=1 // pred_check
      _
    $region31: #{tpu_custom_call.1} parent=1 // pred_check_branch
      %80 = sbr.rel (0) target = $region33
    $region32: #{tpu_custom_call.1} parent=1 // pred_region
      %s82 = ssub.s32 20480, 20480
      %83 = vsyncadd [#allocation12], %s82
      %s84 = sshll.u32 [#allocation11], 4
      %s85 = int_to_ptr.vmem [resolvable:$true] %s84
      %90 = dma.hbm_to_vmem [thread:$0]  %s7, 20480, %s85, [#allocation12], 256, 256, 16
    $region33: #{tpu_custom_call.1} parent=1 // pred_fallthru
      _
    // Predicated region
    $region34: #{tpu_custom_call.1} parent=1 // pred_check
      _
    $region35: #{tpu_custom_call.1} parent=1 // pred_check_branch
      %92 = sbr.rel (0) target = $region37
    $region36: #{tpu_custom_call.1} parent=1 // pred_region
      _
    $region37: #{tpu_custom_call.1} parent=1 // pred_fallthru
      _
    // Predicated region
    $region38: #{tpu_custom_call.1} parent=1 // pred_check
      _
    $region39: #{tpu_custom_call.1} parent=1 // pred_check_branch
      %94 = sbr.rel (0) target = $region41
    $region40: #{tpu_custom_call.1} parent=1 // pred_region
      %95 = dma.done [#allocation3], 128
    $region41: #{tpu_custom_call.1} parent=1 // pred_fallthru
      _
    // Predicated region
    $region42: #{tpu_custom_call.1} parent=1 // pred_check
      _
    $region43: #{tpu_custom_call.1} parent=1 // pred_check_branch
      %97 = sbr.rel (0) target = $region45
    $region44: #{tpu_custom_call.1} parent=1 // pred_region
      %98 = dma.done [#allocation6], 2048
    $region45: #{tpu_custom_call.1} parent=1 // pred_fallthru
      _
    // Predicated region
    $region46: #{tpu_custom_call.1} parent=1 // pred_check
      _
    $region47: #{tpu_custom_call.1} parent=1 // pred_check_branch
      %100 = sbr.rel (0) target = $region49
    $region48: #{tpu_custom_call.1} parent=1 // pred_region
      %101 = dma.done [#allocation6], 32
    $region49: #{tpu_custom_call.1} parent=1 // pred_fallthru
      _
    // Predicated region
    $region50: #{tpu_custom_call.1} parent=1 // pred_check
      _
    $region51: #{tpu_custom_call.1} parent=1 // pred_check_branch
      %103 = sbr.rel (0) target = $region53
    $region52: #{tpu_custom_call.1} parent=1 // pred_region
      %104 = dma.done [#allocation9], 8192
    $region53: #{tpu_custom_call.1} parent=1 // pred_fallthru
      _
    // Predicated region
    $region54: #{tpu_custom_call.1} parent=1 // pred_check
      _
    $region55: #{tpu_custom_call.1} parent=1 // pred_check_branch
      %106 = sbr.rel (0) target = $region57
    $region56: #{tpu_custom_call.1} parent=1 // pred_region
      %107 = dma.done [#allocation9], 20480
    $region57: #{tpu_custom_call.1} parent=1 // pred_fallthru
      _
    // Predicated region
    $region58: #{tpu_custom_call.1} parent=1 // pred_check
      _
    $region59: #{tpu_custom_call.1} parent=1 // pred_check_branch
      %109 = sbr.rel (0) target = $region61
    $region60: #{tpu_custom_call.1} parent=1 // pred_region
      %110 = dma.done [#allocation12], 20480
    $region61: #{tpu_custom_call.1} parent=1 // pred_fallthru
      _
    %v112 = vld [vmem:[#allocation2] sm:$0xff]
    %v113 = vpack.c.bf16 %v112, %v112
    %v114 = vld [vmem:[#allocation5] sm:$0xff]
    %v115 = vld [vmem:[#allocation5 + $0x8] sm:$0xff]
    %v116 = vld [vmem:[#allocation5 + $0x10] sm:$0xff]
    %v117 = vld [vmem:[#allocation5 + $0x18] sm:$0xff]
    %v118 = vld [vmem:[#allocation5 + $0x20] sm:$0xff]
    %v119 = vld [vmem:[#allocation5 + $0x28] sm:$0xff]
    %v120 = vld [vmem:[#allocation5 + $0x30] sm:$0xff]
    %v121 = vld [vmem:[#allocation5 + $0x38] sm:$0xff]
    %v122 = vld [vmem:[#allocation5 + $0x40] sm:$0xff]
    %v123 = vld [vmem:[#allocation5 + $0x48] sm:$0xff]
    %v124 = vld [vmem:[#allocation5 + $0x50] sm:$0xff]
    %v125 = vld [vmem:[#allocation5 + $0x58] sm:$0xff]
    %v126 = vld [vmem:[#allocation5 + $0x60] sm:$0xff]
    %v127 = vld [vmem:[#allocation5 + $0x68] sm:$0xff]
    %v128 = vld [vmem:[#allocation5 + $0x70] sm:$0xff]
    %v129 = vld [vmem:[#allocation5 + $0x78] sm:$0xff]
    %v130 = vld [vmem:[#allocation7] sm:$0x3]
    %v132 = vlaneseq
    %v133 = vshrl.u32 %v132, 7
    %v134 = vsub.s32 0, %v133
    %v135 = vrot.slane %v130, %v134
    %v136 = vlaneseq
    %v137 = vshrl.u32 %v136, 7
    %v138 = vsub.s32 1, %v137
    %v139 = vrot.slane %v130, %v138
    %v158 = vunpack.c.l.b16 %v114
    %v159 = vunpack.c.h.b16 %v114
    %v160 = vunpack.c.l.b16 %v115
    %v161 = vunpack.c.h.b16 %v115
    %v162 = vunpack.c.l.b16 %v116
    %v163 = vunpack.c.h.b16 %v116
    %v164 = vunpack.c.l.b16 %v117
    %v165 = vunpack.c.h.b16 %v117
    %v166 = vunpack.c.l.b16 %v118
    %v167 = vunpack.c.h.b16 %v118
    %v168 = vunpack.c.l.b16 %v119
    %v169 = vunpack.c.h.b16 %v119
    %v170 = vunpack.c.l.b16 %v120
    %v171 = vunpack.c.h.b16 %v120
    %v172 = vunpack.c.l.b16 %v121
    %v173 = vunpack.c.h.b16 %v121
    %v174 = vunpack.c.l.b16 %v122
    %v175 = vunpack.c.h.b16 %v122
    %v176 = vunpack.c.l.b16 %v123
    %v177 = vunpack.c.h.b16 %v123
    %v178 = vunpack.c.l.b16 %v124
    %v179 = vunpack.c.h.b16 %v124
    %v180 = vunpack.c.l.b16 %v125
    %v181 = vunpack.c.h.b16 %v125
    %v182 = vunpack.c.l.b16 %v126
    %v183 = vunpack.c.h.b16 %v126
    %v184 = vunpack.c.l.b16 %v127
    %v185 = vunpack.c.h.b16 %v127
    %v186 = vunpack.c.l.b16 %v128
    %v187 = vunpack.c.h.b16 %v128
    %v188 = vunpack.c.l.b16 %v129
    %v189 = vunpack.c.h.b16 %v129
    %v190 = vpack.c.b16 %v160, %v158
    %v191 = vpack.c.b16 %v161, %v159
    %v192 = vpack.c.b16 %v164, %v162
    %v193 = vpack.c.b16 %v165, %v163
    %v194 = vpack.c.b16 %v168, %v166
    %v195 = vpack.c.b16 %v169, %v167
    %v196 = vpack.c.b16 %v172, %v170
    %v197 = vpack.c.b16 %v173, %v171
    %v198 = vpack.c.b16 %v176, %v174
    %v199 = vpack.c.b16 %v177, %v175
    %v200 = vpack.c.b16 %v180, %v178
    %v201 = vpack.c.b16 %v181, %v179
    %v202 = vpack.c.b16 %v184, %v182
    %v203 = vpack.c.b16 %v185, %v183
    %v204 = vpack.c.b16 %v188, %v186
    %v205 = vpack.c.b16 %v189, %v187
    %222 = vmatprep.subr.bf16.mxu0 %v205
    %223 = vmatpush1.bf16.msra.mxu0 %v204
    %224 = vmatprep.subr.bf16.mxu0 %v203
    %225 = vmatpush1.bf16.msra.mxu0 %v202
    %226 = vmatprep.subr.bf16.mxu0 %v201
    %227 = vmatpush1.bf16.msra.mxu0 %v200
    %228 = vmatprep.subr.bf16.mxu0 %v199
    %229 = vmatpush1.bf16.msra.mxu0 %v198
    %230 = vmatprep.subr.bf16.mxu0 %v197
    %231 = vmatpush1.bf16.msra.mxu0 %v196
    %232 = vmatprep.subr.bf16.mxu0 %v195
    %233 = vmatpush1.bf16.msra.mxu0 %v194
    %234 = vmatprep.subr.bf16.mxu0 %v193
    %235 = vmatpush1.bf16.msra.mxu0 %v192
    %236 = vmatprep.subr.bf16.mxu0 %v191
    %237 = vmatpush1.bf16.msra.mxu0 %v190
    %238 = vmatprep.subr.bf16.mxu0 0
    %239 = vmatpush2.bf16.msra.mxu0 0
    %240 = vmatprep.subr.bf16.mxu0 0
    %241 = vmatpush2.bf16.msra.mxu0 0
    %242 = vmatprep.subr.bf16.mxu0 0
    %243 = vmatpush2.bf16.msra.mxu0 0
    %244 = vmatprep.subr.bf16.mxu0 0
    %245 = vmatpush2.bf16.msra.mxu0 0
    %246 = vmatprep.subr.bf16.mxu0 0
    %247 = vmatpush2.bf16.msra.mxu0 0
    %248 = vmatprep.subr.bf16.mxu0 0
    %249 = vmatpush2.bf16.msra.mxu0 0
    %250 = vmatprep.subr.bf16.mxu0 0
    %251 = vmatpush2.bf16.msra.mxu0 0
    %252 = vmatprep.subr.bf16.mxu0 0
    %253 = vmatpush2.bf16.msra.mxu0 0
    %254 = vmatprep.mubr.bf16.mxu0 0
    %255 = vmatmul.mubr.bf16.gmra.mxu0 %v113
    %v256 = vpop.f32.mrf.mxu0
    %v257 = vadd.f32 %v135, %v256
    %v258 = vpop.f32.mrf.mxu0
    %v259 = vadd.f32 %v139, %v258
    %v260 = vpop.f32.mrf.mxu0
    %v261 = vpop.f32.mrf.mxu0
    %262 = vdwg.mxu0
    %v263 = vmax.f32 %v257, 0.0
    %v264 = vmax.f32 %v259, 0.0
    %v265 = vpack.c.bf16 %v263, %v263
    %v266 = vpack.c.bf16 %v264, %v264
    %v267 = vld [vmem:[#allocation8] sm:$0xff]
    %v268 = vld [vmem:[#allocation8 + $0x8] sm:$0xff]
    %v269 = vld [vmem:[#allocation8 + $0x10] sm:$0xff]
    %v270 = vld [vmem:[#allocation8 + $0x18] sm:$0xff]
    %v271 = vld [vmem:[#allocation8 + $0x20] sm:$0xff]
    %v272 = vld [vmem:[#allocation8 + $0x28] sm:$0xff]
    %v273 = vld [vmem:[#allocation8 + $0x30] sm:$0xff]
    %v274 = vld [vmem:[#allocation8 + $0x38] sm:$0xff]
    %v275 = vld [vmem:[#allocation8 + $0x40] sm:$0xff]
    %v276 = vld [vmem:[#allocation8 + $0x48] sm:$0xff]
    %v277 = vld [vmem:[#allocation8 + $0x50] sm:$0xff]
    %v278 = vld [vmem:[#allocation8 + $0x58] sm:$0xff]
    %v279 = vld [vmem:[#allocation8 + $0x60] sm:$0xff]
    %v280 = vld [vmem:[#allocation8 + $0x68] sm:$0xff]
    %v281 = vld [vmem:[#allocation8 + $0x70] sm:$0xff]
    %v282 = vld [vmem:[#allocation8 + $0x78] sm:$0xff]
    %v283 = vld [vmem:[#allocation8 + $0x80] sm:$0xff]
    %v284 = vld [vmem:[#allocation8 + $0x88] sm:$0xff]
    %v285 = vld [vmem:[#allocation8 + $0x90] sm:$0xff]
    %v286 = vld [vmem:[#allocation8 + $0x98] sm:$0xff]
    %v287 = vld [vmem:[#allocation8 + $0xa0] sm:$0xff]
    %v288 = vld [vmem:[#allocation8 + $0xa8] sm:$0xff]
    %v289 = vld [vmem:[#allocation8 + $0xb0] sm:$0xff]
    %v290 = vld [vmem:[#allocation8 + $0xb8] sm:$0xff]
    %v291 = vld [vmem:[#allocation8 + $0xc0] sm:$0xff]
    %v292 = vld [vmem:[#allocation8 + $0xc8] sm:$0xff]
    %v293 = vld [vmem:[#allocation8 + $0xd0] sm:$0xff]
    %v294 = vld [vmem:[#allocation8 + $0xd8] sm:$0xff]
    %v295 = vld [vmem:[#allocation8 + $0xe0] sm:$0xff]
    %v296 = vld [vmem:[#allocation8 + $0xe8] sm:$0xff]
    %v297 = vld [vmem:[#allocation8 + $0xf0] sm:$0xff]
    %v298 = vld [vmem:[#allocation8 + $0xf8] sm:$0xff]
    %v299 = vld [vmem:[#allocation8 + $0x100] sm:$0xff]
    %v300 = vld [vmem:[#allocation8 + $0x108] sm:$0xff]
    %v301 = vld [vmem:[#allocation8 + $0x110] sm:$0xff]
    %v302 = vld [vmem:[#allocation8 + $0x118] sm:$0xff]
    %v303 = vld [vmem:[#allocation8 + $0x120] sm:$0xff]
    %v304 = vld [vmem:[#allocation8 + $0x128] sm:$0xff]
    %v305 = vld [vmem:[#allocation8 + $0x130] sm:$0xff]
    %v306 = vld [vmem:[#allocation8 + $0x138] sm:$0xff]
    %v307 = vld [vmem:[#allocation8 + $0x140] sm:$0xff]
    %v308 = vld [vmem:[#allocation8 + $0x148] sm:$0xff]
    %v309 = vld [vmem:[#allocation8 + $0x150] sm:$0xff]
    %v310 = vld [vmem:[#allocation8 + $0x158] sm:$0xff]
    %v311 = vld [vmem:[#allocation8 + $0x160] sm:$0xff]
    %v312 = vld [vmem:[#allocation8 + $0x168] sm:$0xff]
    %v313 = vld [vmem:[#allocation8 + $0x170] sm:$0xff]
    %v314 = vld [vmem:[#allocation8 + $0x178] sm:$0xff]
    %v315 = vld [vmem:[#allocation8 + $0x180] sm:$0xff]
    %v316 = vld [vmem:[#allocation8 + $0x188] sm:$0xff]
    %v317 = vld [vmem:[#allocation8 + $0x190] sm:$0xff]
    %v318 = vld [vmem:[#allocation8 + $0x198] sm:$0xff]
    %v319 = vld [vmem:[#allocation8 + $0x1a0] sm:$0xff]
    %v320 = vld [vmem:[#allocation8 + $0x1a8] sm:$0xff]
    %v321 = vld [vmem:[#allocation8 + $0x1b0] sm:$0xff]
    %v322 = vld [vmem:[#allocation8 + $0x1b8] sm:$0xff]
    %v323 = vld [vmem:[#allocation8 + $0x1c0] sm:$0xff]
    %v324 = vld [vmem:[#allocation8 + $0x1c8] sm:$0xff]
    %v325 = vld [vmem:[#allocation8 + $0x1d0] sm:$0xff]
    %v326 = vld [vmem:[#allocation8 + $0x1d8] sm:$0xff]
    %v327 = vld [vmem:[#allocation8 + $0x1e0] sm:$0xff]
    %v328 = vld [vmem:[#allocation8 + $0x1e8] sm:$0xff]
    %v329 = vld [vmem:[#allocation8 + $0x1f0] sm:$0xff]
    %v330 = vld [vmem:[#allocation8 + $0x1f8] sm:$0xff]
    %v331 = vld [vmem:[%s4] sm:$0xf]
    %v333 = vlaneseq
    %v334 = vshrl.u32 %v333, 7
    %v335 = vsub.s32 0, %v334
    %v336 = vrot.slane %v331, %v335
    %v337 = vlaneseq
    %v338 = vshrl.u32 %v337, 7
    %v339 = vsub.s32 1, %v338
    %v340 = vrot.slane %v331, %v339
    %v341 = vlaneseq
    %v342 = vshrl.u32 %v341, 7
    %v343 = vsub.s32 2, %v342
    %v344 = vrot.slane %v331, %v343
    %v345 = vlaneseq
    %v346 = vshrl.u32 %v345, 7
    %v347 = vsub.s32 3, %v346
    %v348 = vrot.slane %v331, %v347
    %v417 = vunpack.c.l.b16 %v267
    %v418 = vunpack.c.h.b16 %v267
    %v419 = vunpack.c.l.b16 %v268
    %v420 = vunpack.c.h.b16 %v268
    %v421 = vunpack.c.l.b16 %v269
    %v422 = vunpack.c.h.b16 %v269
    %v423 = vunpack.c.l.b16 %v270
    %v424 = vunpack.c.h.b16 %v270
    %v425 = vunpack.c.l.b16 %v271
    %v426 = vunpack.c.h.b16 %v271
    %v427 = vunpack.c.l.b16 %v272
    %v428 = vunpack.c.h.b16 %v272
    %v429 = vunpack.c.l.b16 %v273
    %v430 = vunpack.c.h.b16 %v273
    %v431 = vunpack.c.l.b16 %v274
    %v432 = vunpack.c.h.b16 %v274
    %v433 = vunpack.c.l.b16 %v275
    %v434 = vunpack.c.h.b16 %v275
    %v435 = vunpack.c.l.b16 %v276
    %v436 = vunpack.c.h.b16 %v276
    %v437 = vunpack.c.l.b16 %v277
    %v438 = vunpack.c.h.b16 %v277
    %v439 = vunpack.c.l.b16 %v278
    %v440 = vunpack.c.h.b16 %v278
    %v441 = vunpack.c.l.b16 %v279
    %v442 = vunpack.c.h.b16 %v279
    %v443 = vunpack.c.l.b16 %v280
    %v444 = vunpack.c.h.b16 %v280
    %v445 = vunpack.c.l.b16 %v281
    %v446 = vunpack.c.h.b16 %v281
    %v447 = vunpack.c.l.b16 %v282
    %v448 = vunpack.c.h.b16 %v282
    %v449 = vunpack.c.l.b16 %v283
    %v450 = vunpack.c.h.b16 %v283
    %v451 = vunpack.c.l.b16 %v284
    %v452 = vunpack.c.h.b16 %v284
    %v453 = vunpack.c.l.b16 %v285
    %v454 = vunpack.c.h.b16 %v285
    %v455 = vunpack.c.l.b16 %v286
    %v456 = vunpack.c.h.b16 %v286
    %v457 = vunpack.c.l.b16 %v287
    %v458 = vunpack.c.h.b16 %v287
    %v459 = vunpack.c.l.b16 %v288
    %v460 = vunpack.c.h.b16 %v288
    %v461 = vunpack.c.l.b16 %v289
    %v462 = vunpack.c.h.b16 %v289
    %v463 = vunpack.c.l.b16 %v290
    %v464 = vunpack.c.h.b16 %v290
    %v465 = vunpack.c.l.b16 %v291
    %v466 = vunpack.c.h.b16 %v291
    %v467 = vunpack.c.l.b16 %v292
    %v468 = vunpack.c.h.b16 %v292
    %v469 = vunpack.c.l.b16 %v293
    %v470 = vunpack.c.h.b16 %v293
    %v471 = vunpack.c.l.b16 %v294
    %v472 = vunpack.c.h.b16 %v294
    %v473 = vunpack.c.l.b16 %v295
    %v474 = vunpack.c.h.b16 %v295
    %v475 = vunpack.c.l.b16 %v296
    %v476 = vunpack.c.h.b16 %v296
    %v477 = vunpack.c.l.b16 %v297
    %v478 = vunpack.c.h.b16 %v297
    %v479 = vunpack.c.l.b16 %v298
    %v480 = vunpack.c.h.b16 %v298
    %v481 = vunpack.c.l.b16 %v299
    %v482 = vunpack.c.h.b16 %v299
    %v483 = vunpack.c.l.b16 %v300
    %v484 = vunpack.c.h.b16 %v300
    %v485 = vunpack.c.l.b16 %v301
    %v486 = vunpack.c.h.b16 %v301
    %v487 = vunpack.c.l.b16 %v302
    %v488 = vunpack.c.h.b16 %v302
    %v489 = vunpack.c.l.b16 %v303
    %v490 = vunpack.c.h.b16 %v303
    %v491 = vunpack.c.l.b16 %v304
    %v492 = vunpack.c.h.b16 %v304
    %v493 = vunpack.c.l.b16 %v305
    %v494 = vunpack.c.h.b16 %v305
    %v495 = vunpack.c.l.b16 %v306
    %v496 = vunpack.c.h.b16 %v306
    %v497 = vunpack.c.l.b16 %v307
    %v498 = vunpack.c.h.b16 %v307
    %v499 = vunpack.c.l.b16 %v308
    %v500 = vunpack.c.h.b16 %v308
    %v501 = vunpack.c.l.b16 %v309
    %v502 = vunpack.c.h.b16 %v309
    %v503 = vunpack.c.l.b16 %v310
    %v504 = vunpack.c.h.b16 %v310
    %v505 = vunpack.c.l.b16 %v311
    %v506 = vunpack.c.h.b16 %v311
    %v507 = vunpack.c.l.b16 %v312
    %v508 = vunpack.c.h.b16 %v312
    %v509 = vunpack.c.l.b16 %v313
    %v510 = vunpack.c.h.b16 %v313
    %v511 = vunpack.c.l.b16 %v314
    %v512 = vunpack.c.h.b16 %v314
    %v513 = vunpack.c.l.b16 %v315
    %v514 = vunpack.c.h.b16 %v315
    %v515 = vunpack.c.l.b16 %v316
    %v516 = vunpack.c.h.b16 %v316
    %v517 = vunpack.c.l.b16 %v317
    %v518 = vunpack.c.h.b16 %v317
    %v519 = vunpack.c.l.b16 %v318
    %v520 = vunpack.c.h.b16 %v318
    %v521 = vunpack.c.l.b16 %v319
    %v522 = vunpack.c.h.b16 %v319
    %v523 = vunpack.c.l.b16 %v320
    %v524 = vunpack.c.h.b16 %v320
    %v525 = vunpack.c.l.b16 %v321
    %v526 = vunpack.c.h.b16 %v321
    %v527 = vunpack.c.l.b16 %v322
    %v528 = vunpack.c.h.b16 %v322
    %v529 = vunpack.c.l.b16 %v323
    %v530 = vunpack.c.h.b16 %v323
    %v531 = vunpack.c.l.b16 %v324
    %v532 = vunpack.c.h.b16 %v324
    %v533 = vunpack.c.l.b16 %v325
    %v534 = vunpack.c.h.b16 %v325
    %v535 = vunpack.c.l.b16 %v326
    %v536 = vunpack.c.h.b16 %v326
    %v537 = vunpack.c.l.b16 %v327
    %v538 = vunpack.c.h.b16 %v327
    %v539 = vunpack.c.l.b16 %v328
    %v540 = vunpack.c.h.b16 %v328
    %v541 = vunpack.c.l.b16 %v329
    %v542 = vunpack.c.h.b16 %v329
    %v543 = vunpack.c.l.b16 %v330
    %v544 = vunpack.c.h.b16 %v330
    %v545 = vpack.c.b16 %v421, %v417
    %v546 = vpack.c.b16 %v422, %v418
    %v547 = vpack.c.b16 %v423, %v419
    %v548 = vpack.c.b16 %v424, %v420
    %v549 = vpack.c.b16 %v429, %v425
    %v550 = vpack.c.b16 %v430, %v426
    %v551 = vpack.c.b16 %v431, %v427
    %v552 = vpack.c.b16 %v432, %v428
    %v553 = vpack.c.b16 %v437, %v433
    %v554 = vpack.c.b16 %v438, %v434
    %v555 = vpack.c.b16 %v439, %v435
    %v556 = vpack.c.b16 %v440, %v436
    %v557 = vpack.c.b16 %v445, %v441
    %v558 = vpack.c.b16 %v446, %v442
    %v559 = vpack.c.b16 %v447, %v443
    %v560 = vpack.c.b16 %v448, %v444
    %v561 = vpack.c.b16 %v453, %v449
    %v562 = vpack.c.b16 %v454, %v450
    %v563 = vpack.c.b16 %v455, %v451
    %v564 = vpack.c.b16 %v456, %v452
    %v565 = vpack.c.b16 %v461, %v457
    %v566 = vpack.c.b16 %v462, %v458
    %v567 = vpack.c.b16 %v463, %v459
    %v568 = vpack.c.b16 %v464, %v460
    %v569 = vpack.c.b16 %v469, %v465
    %v570 = vpack.c.b16 %v470, %v466
    %v571 = vpack.c.b16 %v471, %v467
    %v572 = vpack.c.b16 %v472, %v468
    %v573 = vpack.c.b16 %v477, %v473
    %v574 = vpack.c.b16 %v478, %v474
    %v575 = vpack.c.b16 %v479, %v475
    %v576 = vpack.c.b16 %v480, %v476
    %v577 = vpack.c.b16 %v485, %v481
    %v578 = vpack.c.b16 %v486, %v482
    %v579 = vpack.c.b16 %v487, %v483
    %v580 = vpack.c.b16 %v488, %v484
    %v581 = vpack.c.b16 %v493, %v489
    %v582 = vpack.c.b16 %v494, %v490
    %v583 = vpack.c.b16 %v495, %v491
    %v584 = vpack.c.b16 %v496, %v492
    %v585 = vpack.c.b16 %v501, %v497
    %v586 = vpack.c.b16 %v502, %v498
    %v587 = vpack.c.b16 %v503, %v499
    %v588 = vpack.c.b16 %v504, %v500
    %v589 = vpack.c.b16 %v509, %v505
    %v590 = vpack.c.b16 %v510, %v506
    %v591 = vpack.c.b16 %v511, %v507
    %v592 = vpack.c.b16 %v512, %v508
    %v593 = vpack.c.b16 %v517, %v513
    %v594 = vpack.c.b16 %v518, %v514
    %v595 = vpack.c.b16 %v519, %v515
    %v596 = vpack.c.b16 %v520, %v516
    %v597 = vpack.c.b16 %v525, %v521
    %v598 = vpack.c.b16 %v526, %v522
    %v599 = vpack.c.b16 %v527, %v523
    %v600 = vpack.c.b16 %v528, %v524
    %v601 = vpack.c.b16 %v533, %v529
    %v602 = vpack.c.b16 %v534, %v530
    %v603 = vpack.c.b16 %v535, %v531
    %v604 = vpack.c.b16 %v536, %v532
    %v605 = vpack.c.b16 %v541, %v537
    %v606 = vpack.c.b16 %v542, %v538
    %v607 = vpack.c.b16 %v543, %v539
    %v608 = vpack.c.b16 %v544, %v540
    %673 = vmatprep.subr.bf16.mxu0 %v574
    %674 = vmatpush1.bf16.msra.mxu0 %v573
    %675 = vmatprep.subr.bf16.mxu0 %v570
    %676 = vmatpush1.bf16.msra.mxu0 %v569
    %677 = vmatprep.subr.bf16.mxu0 %v566
    %678 = vmatpush1.bf16.msra.mxu0 %v565
    %679 = vmatprep.subr.bf16.mxu0 %v562
    %680 = vmatpush1.bf16.msra.mxu0 %v561
    %681 = vmatprep.subr.bf16.mxu0 %v558
    %682 = vmatpush1.bf16.msra.mxu0 %v557
    %683 = vmatprep.subr.bf16.mxu0 %v554
    %684 = vmatpush1.bf16.msra.mxu0 %v553
    %685 = vmatprep.subr.bf16.mxu0 %v550
    %686 = vmatpush1.bf16.msra.mxu0 %v549
    %687 = vmatprep.subr.bf16.mxu0 %v546
    %688 = vmatpush1.bf16.msra.mxu0 %v545
    %689 = vmatprep.subr.bf16.mxu0 %v606
    %690 = vmatpush2.bf16.msra.mxu0 %v605
    %691 = vmatprep.subr.bf16.mxu0 %v602
    %692 = vmatpush2.bf16.msra.mxu0 %v601
    %693 = vmatprep.subr.bf16.mxu0 %v598
    %694 = vmatpush2.bf16.msra.mxu0 %v597
    %695 = vmatprep.subr.bf16.mxu0 %v594
    %696 = vmatpush2.bf16.msra.mxu0 %v593
    %697 = vmatprep.subr.bf16.mxu0 %v590
    %698 = vmatpush2.bf16.msra.mxu0 %v589
    %699 = vmatprep.subr.bf16.mxu0 %v586
    %700 = vmatpush2.bf16.msra.mxu0 %v585
    %701 = vmatprep.subr.bf16.mxu0 %v582
    %702 = vmatpush2.bf16.msra.mxu0 %v581
    %703 = vmatprep.subr.bf16.mxu0 %v578
    %704 = vmatpush2.bf16.msra.mxu0 %v577
    %705 = vmatprep.mubr.bf16.mxu0 %v266
    %706 = vmatmul.mubr.bf16.gmra.mxu0 %v265
    %v707 = vpop.f32.mrf.mxu0
    %v708 = vadd.f32 %v336, %v707
    %v709 = vpop.f32.mrf.mxu0
    %v710 = vadd.f32 %v340, %v709
    %v711 = vpop.f32.mrf.mxu0
    %v712 = vpop.f32.mrf.mxu0
    %713 = vdwg.mxu0
    %714 = vmatprep.subr.bf16.mxu0 %v576
    %715 = vmatpush1.bf16.msra.mxu0 %v575
    %716 = vmatprep.subr.bf16.mxu0 %v572
    %717 = vmatpush1.bf16.msra.mxu0 %v571
    %718 = vmatprep.subr.bf16.mxu0 %v568
    %719 = vmatpush1.bf16.msra.mxu0 %v567
    %720 = vmatprep.subr.bf16.mxu0 %v564
    %721 = vmatpush1.bf16.msra.mxu0 %v563
    %722 = vmatprep.subr.bf16.mxu0 %v560
    %723 = vmatpush1.bf16.msra.mxu0 %v559
    %724 = vmatprep.subr.bf16.mxu0 %v556
    %725 = vmatpush1.bf16.msra.mxu0 %v555
    %726 = vmatprep.subr.bf16.mxu0 %v552
    %727 = vmatpush1.bf16.msra.mxu0 %v551
    %728 = vmatprep.subr.bf16.mxu0 %v548
    %729 = vmatpush1.bf16.msra.mxu0 %v547
    %730 = vmatprep.subr.bf16.mxu0 %v608
    %731 = vmatpush2.bf16.msra.mxu0 %v607
    %732 = vmatprep.subr.bf16.mxu0 %v604
    %733 = vmatpush2.bf16.msra.mxu0 %v603
    %734 = vmatprep.subr.bf16.mxu0 %v600
    %735 = vmatpush2.bf16.msra.mxu0 %v599
    %736 = vmatprep.subr.bf16.mxu0 %v596
    %737 = vmatpush2.bf16.msra.mxu0 %v595
    %738 = vmatprep.subr.bf16.mxu0 %v592
    %739 = vmatpush2.bf16.msra.mxu0 %v591
    %740 = vmatprep.subr.bf16.mxu0 %v588
    %741 = vmatpush2.bf16.msra.mxu0 %v587
    %742 = vmatprep.subr.bf16.mxu0 %v584
    %743 = vmatpush2.bf16.msra.mxu0 %v583
    %744 = vmatprep.subr.bf16.mxu0 %v580
    %745 = vmatpush2.bf16.msra.mxu0 %v579
    %746 = vmatprep.mubr.bf16.mxu0 %v266
    %747 = vmatmul.mubr.bf16.gmra.mxu0 %v265
    %v748 = vpop.f32.mrf.mxu0
    %v749 = vadd.f32 %v344, %v748
    %v750 = vpop.f32.mrf.mxu0
    %v751 = vadd.f32 %v348, %v750
    %v752 = vpop.f32.mrf.mxu0
    %v753 = vpop.f32.mrf.mxu0
    %754 = vdwg.mxu0
    %v755 = vmax.f32 %v708, 0.0
    %v756 = vmax.f32 %v710, 0.0
    %v757 = vmax.f32 %v749, 0.0
    %v758 = vmax.f32 %v751, 0.0
    %v759 = vpack.c.bf16 %v755, %v755
    %v760 = vpack.c.bf16 %v756, %v756
    %v761 = vpack.c.bf16 %v757, %v757
    %v762 = vpack.c.bf16 %v758, %v758
    %v763 = vld [vmem:[#allocation10] sm:$0xff]
    %v764 = vld [vmem:[#allocation10 + $0x8] sm:$0xff]
    %v765 = vld [vmem:[#allocation10 + $0x10] sm:$0xf]
    %v766 = vld [vmem:[#allocation10 + $0x14] sm:$0xff]
    %v767 = vld [vmem:[#allocation10 + $0x1c] sm:$0xff]
    %v768 = vld [vmem:[#allocation10 + $0x24] sm:$0xf]
    %v769 = vld [vmem:[#allocation10 + $0x28] sm:$0xff]
    %v770 = vld [vmem:[#allocation10 + $0x30] sm:$0xff]
    %v771 = vld [vmem:[#allocation10 + $0x38] sm:$0xf]
    %v772 = vld [vmem:[#allocation10 + $0x3c] sm:$0xff]
    %v773 = vld [vmem:[#allocation10 + $0x44] sm:$0xff]
    %v774 = vld [vmem:[#allocation10 + $0x4c] sm:$0xf]
    %v775 = vld [vmem:[#allocation10 + $0x50] sm:$0xff]
    %v776 = vld [vmem:[#allocation10 + $0x58] sm:$0xff]
    %v777 = vld [vmem:[#allocation10 + $0x60] sm:$0xf]
    %v778 = vld [vmem:[#allocation10 + $0x64] sm:$0xff]
    %v779 = vld [vmem:[#allocation10 + $0x6c] sm:$0xff]
    %v780 = vld [vmem:[#allocation10 + $0x74] sm:$0xf]
    %v781 = vld [vmem:[#allocation10 + $0x78] sm:$0xff]
    %v782 = vld [vmem:[#allocation10 + $0x80] sm:$0xff]
    %v783 = vld [vmem:[#allocation10 + $0x88] sm:$0xf]
    %v784 = vld [vmem:[#allocation10 + $0x8c] sm:$0xff]
    %v785 = vld [vmem:[#allocation10 + $0x94] sm:$0xff]
    %v786 = vld [vmem:[#allocation10 + $0x9c] sm:$0xf]
    %v787 = vld [vmem:[#allocation10 + $0xa0] sm:$0xff]
    %v788 = vld [vmem:[#allocation10 + $0xa8] sm:$0xff]
    %v789 = vld [vmem:[#allocation10 + $0xb0] sm:$0xf]
    %v790 = vld [vmem:[#allocation10 + $0xb4] sm:$0xff]
    %v791 = vld [vmem:[#allocation10 + $0xbc] sm:$0xff]
    %v792 = vld [vmem:[#allocation10 + $0xc4] sm:$0xf]
    %v793 = vld [vmem:[#allocation10 + $0xc8] sm:$0xff]
    %v794 = vld [vmem:[#allocation10 + $0xd0] sm:$0xff]
    %v795 = vld [vmem:[#allocation10 + $0xd8] sm:$0xf]
    %v796 = vld [vmem:[#allocation10 + $0xdc] sm:$0xff]
    %v797 = vld [vmem:[#allocation10 + $0xe4] sm:$0xff]
    %v798 = vld [vmem:[#allocation10 + $0xec] sm:$0xf]
    %v799 = vld [vmem:[#allocation10 + $0xf0] sm:$0xff]
    %v800 = vld [vmem:[#allocation10 + $0xf8] sm:$0xff]
    %v801 = vld [vmem:[#allocation10 + $0x100] sm:$0xf]
    %v802 = vld [vmem:[#allocation10 + $0x104] sm:$0xff]
    %v803 = vld [vmem:[#allocation10 + $0x10c] sm:$0xff]
    %v804 = vld [vmem:[#allocation10 + $0x114] sm:$0xf]
    %v805 = vld [vmem:[#allocation10 + $0x118] sm:$0xff]
    %v806 = vld [vmem:[#allocation10 + $0x120] sm:$0xff]
    %v807 = vld [vmem:[#allocation10 + $0x128] sm:$0xf]
    %v808 = vld [vmem:[#allocation10 + $0x12c] sm:$0xff]
    %v809 = vld [vmem:[#allocation10 + $0x134] sm:$0xff]
    %v810 = vld [vmem:[#allocation10 + $0x13c] sm:$0xf]
    %v811 = vld [vmem:[#allocation10 + $0x140] sm:$0xff]
    %v812 = vld [vmem:[#allocation10 + $0x148] sm:$0xff]
    %v813 = vld [vmem:[#allocation10 + $0x150] sm:$0xf]
    %v814 = vld [vmem:[#allocation10 + $0x154] sm:$0xff]
    %v815 = vld [vmem:[#allocation10 + $0x15c] sm:$0xff]
    %v816 = vld [vmem:[#allocation10 + $0x164] sm:$0xf]
    %v817 = vld [vmem:[#allocation10 + $0x168] sm:$0xff]
    %v818 = vld [vmem:[#allocation10 + $0x170] sm:$0xff]
    %v819 = vld [vmem:[#allocation10 + $0x178] sm:$0xf]
    %v820 = vld [vmem:[#allocation10 + $0x17c] sm:$0xff]
    %v821 = vld [vmem:[#allocation10 + $0x184] sm:$0xff]
    %v822 = vld [vmem:[#allocation10 + $0x18c] sm:$0xf]
    %v823 = vld [vmem:[#allocation10 + $0x190] sm:$0xff]
    %v824 = vld [vmem:[#allocation10 + $0x198] sm:$0xff]
    %v825 = vld [vmem:[#allocation10 + $0x1a0] sm:$0xf]
    %v826 = vld [vmem:[#allocation10 + $0x1a4] sm:$0xff]
    %v827 = vld [vmem:[#allocation10 + $0x1ac] sm:$0xff]
    %v828 = vld [vmem:[#allocation10 + $0x1b4] sm:$0xf]
    %v829 = vld [vmem:[#allocation10 + $0x1b8] sm:$0xff]
    %v830 = vld [vmem:[#allocation10 + $0x1c0] sm:$0xff]
    %v831 = vld [vmem:[#allocation10 + $0x1c8] sm:$0xf]
    %v832 = vld [vmem:[#allocation10 + $0x1cc] sm:$0xff]
    %v833 = vld [vmem:[#allocation10 + $0x1d4] sm:$0xff]
    %v834 = vld [vmem:[#allocation10 + $0x1dc] sm:$0xf]
    %v835 = vld [vmem:[#allocation10 + $0x1e0] sm:$0xff]
    %v836 = vld [vmem:[#allocation10 + $0x1e8] sm:$0xff]
    %v837 = vld [vmem:[#allocation10 + $0x1f0] sm:$0xf]
    %v838 = vld [vmem:[#allocation10 + $0x1f4] sm:$0xff]
    %v839 = vld [vmem:[#allocation10 + $0x1fc] sm:$0xff]
    %v840 = vld [vmem:[#allocation10 + $0x204] sm:$0xf]
    %v841 = vld [vmem:[#allocation10 + $0x208] sm:$0xff]
    %v842 = vld [vmem:[#allocation10 + $0x210] sm:$0xff]
    %v843 = vld [vmem:[#allocation10 + $0x218] sm:$0xf]
    %v844 = vld [vmem:[#allocation10 + $0x21c] sm:$0xff]
    %v845 = vld [vmem:[#allocation10 + $0x224] sm:$0xff]
    %v846 = vld [vmem:[#allocation10 + $0x22c] sm:$0xf]
    %v847 = vld [vmem:[#allocation10 + $0x230] sm:$0xff]
    %v848 = vld [vmem:[#allocation10 + $0x238] sm:$0xff]
    %v849 = vld [vmem:[#allocation10 + $0x240] sm:$0xf]
    %v850 = vld [vmem:[#allocation10 + $0x244] sm:$0xff]
    %v851 = vld [vmem:[#allocation10 + $0x24c] sm:$0xff]
    %v852 = vld [vmem:[#allocation10 + $0x254] sm:$0xf]
    %v853 = vld [vmem:[#allocation10 + $0x258] sm:$0xff]
    %v854 = vld [vmem:[#allocation10 + $0x260] sm:$0xff]
    %v855 = vld [vmem:[#allocation10 + $0x268] sm:$0xf]
    %v856 = vld [vmem:[#allocation10 + $0x26c] sm:$0xff]
    %v857 = vld [vmem:[#allocation10 + $0x274] sm:$0xff]
    %v858 = vld [vmem:[#allocation10 + $0x27c] sm:$0xf]
    %v859 = vld [vmem:[#allocation10 + $0x280] sm:$0xff]
    %v860 = vld [vmem:[#allocation10 + $0x288] sm:$0xff]
    %v861 = vld [vmem:[#allocation10 + $0x290] sm:$0xf]
    %v862 = vld [vmem:[#allocation10 + $0x294] sm:$0xff]
    %v863 = vld [vmem:[#allocation10 + $0x29c] sm:$0xff]
    %v864 = vld [vmem:[#allocation10 + $0x2a4] sm:$0xf]
    %v865 = vld [vmem:[#allocation10 + $0x2a8] sm:$0xff]
    %v866 = vld [vmem:[#allocation10 + $0x2b0] sm:$0xff]
    %v867 = vld [vmem:[#allocation10 + $0x2b8] sm:$0xf]
    %v868 = vld [vmem:[#allocation10 + $0x2bc] sm:$0xff]
    %v869 = vld [vmem:[#allocation10 + $0x2c4] sm:$0xff]
    %v870 = vld [vmem:[#allocation10 + $0x2cc] sm:$0xf]
    %v871 = vld [vmem:[#allocation10 + $0x2d0] sm:$0xff]
    %v872 = vld [vmem:[#allocation10 + $0x2d8] sm:$0xff]
    %v873 = vld [vmem:[#allocation10 + $0x2e0] sm:$0xf]
    %v874 = vld [vmem:[#allocation10 + $0x2e4] sm:$0xff]
    %v875 = vld [vmem:[#allocation10 + $0x2ec] sm:$0xff]
    %v876 = vld [vmem:[#allocation10 + $0x2f4] sm:$0xf]
    %v877 = vld [vmem:[#allocation10 + $0x2f8] sm:$0xff]
    %v878 = vld [vmem:[#allocation10 + $0x300] sm:$0xff]
    %v879 = vld [vmem:[#allocation10 + $0x308] sm:$0xf]
    %v880 = vld [vmem:[#allocation10 + $0x30c] sm:$0xff]
    %v881 = vld [vmem:[#allocation10 + $0x314] sm:$0xff]
    %v882 = vld [vmem:[#allocation10 + $0x31c] sm:$0xf]
    %v883 = vld [vmem:[#allocation10 + $0x320] sm:$0xff]
    %v884 = vld [vmem:[#allocation10 + $0x328] sm:$0xff]
    %v885 = vld [vmem:[#allocation10 + $0x330] sm:$0xf]
    %v886 = vld [vmem:[#allocation10 + $0x334] sm:$0xff]
    %v887 = vld [vmem:[#allocation10 + $0x33c] sm:$0xff]
    %v888 = vld [vmem:[#allocation10 + $0x344] sm:$0xf]
    %v889 = vld [vmem:[#allocation10 + $0x348] sm:$0xff]
    %v890 = vld [vmem:[#allocation10 + $0x350] sm:$0xff]
    %v891 = vld [vmem:[#allocation10 + $0x358] sm:$0xf]
    %v892 = vld [vmem:[#allocation10 + $0x35c] sm:$0xff]
    %v893 = vld [vmem:[#allocation10 + $0x364] sm:$0xff]
    %v894 = vld [vmem:[#allocation10 + $0x36c] sm:$0xf]
    %v895 = vld [vmem:[#allocation10 + $0x370] sm:$0xff]
    %v896 = vld [vmem:[#allocation10 + $0x378] sm:$0xff]
    %v897 = vld [vmem:[#allocation10 + $0x380] sm:$0xf]
    %v898 = vld [vmem:[#allocation10 + $0x384] sm:$0xff]
    %v899 = vld [vmem:[#allocation10 + $0x38c] sm:$0xff]
    %v900 = vld [vmem:[#allocation10 + $0x394] sm:$0xf]
    %v901 = vld [vmem:[#allocation10 + $0x398] sm:$0xff]
    %v902 = vld [vmem:[#allocation10 + $0x3a0] sm:$0xff]
    %v903 = vld [vmem:[#allocation10 + $0x3a8] sm:$0xf]
    %v904 = vld [vmem:[#allocation10 + $0x3ac] sm:$0xff]
    %v905 = vld [vmem:[#allocation10 + $0x3b4] sm:$0xff]
    %v906 = vld [vmem:[#allocation10 + $0x3bc] sm:$0xf]
    %v907 = vld [vmem:[#allocation10 + $0x3c0] sm:$0xff]
    %v908 = vld [vmem:[#allocation10 + $0x3c8] sm:$0xff]
    %v909 = vld [vmem:[#allocation10 + $0x3d0] sm:$0xf]
    %v910 = vld [vmem:[#allocation10 + $0x3d4] sm:$0xff]
    %v911 = vld [vmem:[#allocation10 + $0x3dc] sm:$0xff]
    %v912 = vld [vmem:[#allocation10 + $0x3e4] sm:$0xf]
    %v913 = vld [vmem:[#allocation10 + $0x3e8] sm:$0xff]
    %v914 = vld [vmem:[#allocation10 + $0x3f0] sm:$0xff]
    %v915 = vld [vmem:[#allocation10 + $0x3f8] sm:$0xf]
    %v916 = vld [vmem:[#allocation10 + $0x3fc] sm:$0xff]
    %v917 = vld [vmem:[#allocation10 + $0x404] sm:$0xff]
    %v918 = vld [vmem:[#allocation10 + $0x40c] sm:$0xf]
    %v919 = vld [vmem:[#allocation10 + $0x410] sm:$0xff]
    %v920 = vld [vmem:[#allocation10 + $0x418] sm:$0xff]
    %v921 = vld [vmem:[#allocation10 + $0x420] sm:$0xf]
    %v922 = vld [vmem:[#allocation10 + $0x424] sm:$0xff]
    %v923 = vld [vmem:[#allocation10 + $0x42c] sm:$0xff]
    %v924 = vld [vmem:[#allocation10 + $0x434] sm:$0xf]
    %v925 = vld [vmem:[#allocation10 + $0x438] sm:$0xff]
    %v926 = vld [vmem:[#allocation10 + $0x440] sm:$0xff]
    %v927 = vld [vmem:[#allocation10 + $0x448] sm:$0xf]
    %v928 = vld [vmem:[#allocation10 + $0x44c] sm:$0xff]
    %v929 = vld [vmem:[#allocation10 + $0x454] sm:$0xff]
    %v930 = vld [vmem:[#allocation10 + $0x45c] sm:$0xf]
    %v931 = vld [vmem:[#allocation10 + $0x460] sm:$0xff]
    %v932 = vld [vmem:[#allocation10 + $0x468] sm:$0xff]
    %v933 = vld [vmem:[#allocation10 + $0x470] sm:$0xf]
    %v934 = vld [vmem:[#allocation10 + $0x474] sm:$0xff]
    %v935 = vld [vmem:[#allocation10 + $0x47c] sm:$0xff]
    %v936 = vld [vmem:[#allocation10 + $0x484] sm:$0xf]
    %v937 = vld [vmem:[#allocation10 + $0x488] sm:$0xff]
    %v938 = vld [vmem:[#allocation10 + $0x490] sm:$0xff]
    %v939 = vld [vmem:[#allocation10 + $0x498] sm:$0xf]
    %v940 = vld [vmem:[#allocation10 + $0x49c] sm:$0xff]
    %v941 = vld [vmem:[#allocation10 + $0x4a4] sm:$0xff]
    %v942 = vld [vmem:[#allocation10 + $0x4ac] sm:$0xf]
    %v943 = vld [vmem:[#allocation10 + $0x4b0] sm:$0xff]
    %v944 = vld [vmem:[#allocation10 + $0x4b8] sm:$0xff]
    %v945 = vld [vmem:[#allocation10 + $0x4c0] sm:$0xf]
    %v946 = vld [vmem:[#allocation10 + $0x4c4] sm:$0xff]
    %v947 = vld [vmem:[#allocation10 + $0x4cc] sm:$0xff]
    %v948 = vld [vmem:[#allocation10 + $0x4d4] sm:$0xf]
    %v949 = vld [vmem:[#allocation10 + $0x4d8] sm:$0xff]
    %v950 = vld [vmem:[#allocation10 + $0x4e0] sm:$0xff]
    %v951 = vld [vmem:[#allocation10 + $0x4e8] sm:$0xf]
    %v952 = vld [vmem:[#allocation10 + $0x4ec] sm:$0xff]
    %v953 = vld [vmem:[#allocation10 + $0x4f4] sm:$0xff]
    %v954 = vld [vmem:[#allocation10 + $0x4fc] sm:$0xf]
    %v955 = vld [vmem:[%s6] sm:$0x1f]
    %v957 = vlaneseq
    %v958 = vshrl.u32 %v957, 7
    %v959 = vsub.s32 0, %v958
    %v960 = vrot.slane %v955, %v959
    %v961 = vlaneseq
    %v962 = vshrl.u32 %v961, 7
    %v963 = vsub.s32 1, %v962
    %v964 = vrot.slane %v955, %v963
    %v965 = vlaneseq
    %v966 = vshrl.u32 %v965, 7
    %v967 = vsub.s32 2, %v966
    %v968 = vrot.slane %v955, %v967
    %v969 = vlaneseq
    %v970 = vshrl.u32 %v969, 7
    %v971 = vsub.s32 3, %v970
    %v972 = vrot.slane %v955, %v971
    %v973 = vlaneseq
    %v974 = vshrl.u32 %v973, 7
    %v975 = vsub.s32 4, %v974
    %v976 = vrot.slane %v955, %v975
    %v1174 = vunpack.c.l.b16 %v763
    %v1175 = vunpack.c.h.b16 %v763
    %v1176 = vunpack.c.l.b16 %v764
    %v1177 = vunpack.c.h.b16 %v764
    %v1178 = vunpack.c.l.b16 %v765
    %v1179 = vunpack.c.l.b16 %v766
    %v1180 = vunpack.c.h.b16 %v766
    %v1181 = vunpack.c.l.b16 %v767
    %v1182 = vunpack.c.h.b16 %v767
    %v1183 = vunpack.c.l.b16 %v768
    %v1184 = vunpack.c.l.b16 %v769
    %v1185 = vunpack.c.h.b16 %v769
    %v1186 = vunpack.c.l.b16 %v770
    %v1187 = vunpack.c.h.b16 %v770
    %v1188 = vunpack.c.l.b16 %v771
    %v1189 = vunpack.c.l.b16 %v772
    %v1190 = vunpack.c.h.b16 %v772
    %v1191 = vunpack.c.l.b16 %v773
    %v1192 = vunpack.c.h.b16 %v773
    %v1193 = vunpack.c.l.b16 %v774
    %v1194 = vunpack.c.l.b16 %v775
    %v1195 = vunpack.c.h.b16 %v775
    %v1196 = vunpack.c.l.b16 %v776
    %v1197 = vunpack.c.h.b16 %v776
    %v1198 = vunpack.c.l.b16 %v777
    %v1199 = vunpack.c.l.b16 %v778
    %v1200 = vunpack.c.h.b16 %v778
    %v1201 = vunpack.c.l.b16 %v779
    %v1202 = vunpack.c.h.b16 %v779
    %v1203 = vunpack.c.l.b16 %v780
    %v1204 = vunpack.c.l.b16 %v781
    %v1205 = vunpack.c.h.b16 %v781
    %v1206 = vunpack.c.l.b16 %v782
    %v1207 = vunpack.c.h.b16 %v782
    %v1208 = vunpack.c.l.b16 %v783
    %v1209 = vunpack.c.l.b16 %v784
    %v1210 = vunpack.c.h.b16 %v784
    %v1211 = vunpack.c.l.b16 %v785
    %v1212 = vunpack.c.h.b16 %v785
    %v1213 = vunpack.c.l.b16 %v786
    %v1214 = vunpack.c.l.b16 %v787
    %v1215 = vunpack.c.h.b16 %v787
    %v1216 = vunpack.c.l.b16 %v788
    %v1217 = vunpack.c.h.b16 %v788
    %v1218 = vunpack.c.l.b16 %v789
    %v1219 = vunpack.c.l.b16 %v790
    %v1220 = vunpack.c.h.b16 %v790
    %v1221 = vunpack.c.l.b16 %v791
    %v1222 = vunpack.c.h.b16 %v791
    %v1223 = vunpack.c.l.b16 %v792
    %v1224 = vunpack.c.l.b16 %v793
    %v1225 = vunpack.c.h.b16 %v793
    %v1226 = vunpack.c.l.b16 %v794
    %v1227 = vunpack.c.h.b16 %v794
    %v1228 = vunpack.c.l.b16 %v795
    %v1229 = vunpack.c.l.b16 %v796
    %v1230 = vunpack.c.h.b16 %v796
    %v1231 = vunpack.c.l.b16 %v797
    %v1232 = vunpack.c.h.b16 %v797
    %v1233 = vunpack.c.l.b16 %v798
    %v1234 = vunpack.c.l.b16 %v799
    %v1235 = vunpack.c.h.b16 %v799
    %v1236 = vunpack.c.l.b16 %v800
    %v1237 = vunpack.c.h.b16 %v800
    %v1238 = vunpack.c.l.b16 %v801
    %v1239 = vunpack.c.l.b16 %v802
    %v1240 = vunpack.c.h.b16 %v802
    %v1241 = vunpack.c.l.b16 %v803
    %v1242 = vunpack.c.h.b16 %v803
    %v1243 = vunpack.c.l.b16 %v804
    %v1244 = vunpack.c.l.b16 %v805
    %v1245 = vunpack.c.h.b16 %v805
    %v1246 = vunpack.c.l.b16 %v806
    %v1247 = vunpack.c.h.b16 %v806
    %v1248 = vunpack.c.l.b16 %v807
    %v1249 = vunpack.c.l.b16 %v808
    %v1250 = vunpack.c.h.b16 %v808
    %v1251 = vunpack.c.l.b16 %v809
    %v1252 = vunpack.c.h.b16 %v809
    %v1253 = vunpack.c.l.b16 %v810
    %v1254 = vunpack.c.l.b16 %v811
    %v1255 = vunpack.c.h.b16 %v811
    %v1256 = vunpack.c.l.b16 %v812
    %v1257 = vunpack.c.h.b16 %v812
    %v1258 = vunpack.c.l.b16 %v813
    %v1259 = vunpack.c.l.b16 %v814
    %v1260 = vunpack.c.h.b16 %v814
    %v1261 = vunpack.c.l.b16 %v815
    %v1262 = vunpack.c.h.b16 %v815
    %v1263 = vunpack.c.l.b16 %v816
    %v1264 = vunpack.c.l.b16 %v817
    %v1265 = vunpack.c.h.b16 %v817
    %v1266 = vunpack.c.l.b16 %v818
    %v1267 = vunpack.c.h.b16 %v818
    %v1268 = vunpack.c.l.b16 %v819
    %v1269 = vunpack.c.l.b16 %v820
    %v1270 = vunpack.c.h.b16 %v820
    %v1271 = vunpack.c.l.b16 %v821
    %v1272 = vunpack.c.h.b16 %v821
    %v1273 = vunpack.c.l.b16 %v822
    %v1274 = vunpack.c.l.b16 %v823
    %v1275 = vunpack.c.h.b16 %v823
    %v1276 = vunpack.c.l.b16 %v824
    %v1277 = vunpack.c.h.b16 %v824
    %v1278 = vunpack.c.l.b16 %v825
    %v1279 = vunpack.c.l.b16 %v826
    %v1280 = vunpack.c.h.b16 %v826
    %v1281 = vunpack.c.l.b16 %v827
    %v1282 = vunpack.c.h.b16 %v827
    %v1283 = vunpack.c.l.b16 %v828
    %v1284 = vunpack.c.l.b16 %v829
    %v1285 = vunpack.c.h.b16 %v829
    %v1286 = vunpack.c.l.b16 %v830
    %v1287 = vunpack.c.h.b16 %v830
    %v1288 = vunpack.c.l.b16 %v831
    %v1289 = vunpack.c.l.b16 %v832
    %v1290 = vunpack.c.h.b16 %v832
    %v1291 = vunpack.c.l.b16 %v833
    %v1292 = vunpack.c.h.b16 %v833
    %v1293 = vunpack.c.l.b16 %v834
    %v1294 = vunpack.c.l.b16 %v835
    %v1295 = vunpack.c.h.b16 %v835
    %v1296 = vunpack.c.l.b16 %v836
    %v1297 = vunpack.c.h.b16 %v836
    %v1298 = vunpack.c.l.b16 %v837
    %v1299 = vunpack.c.l.b16 %v838
    %v1300 = vunpack.c.h.b16 %v838
    %v1301 = vunpack.c.l.b16 %v839
    %v1302 = vunpack.c.h.b16 %v839
    %v1303 = vunpack.c.l.b16 %v840
    %v1304 = vunpack.c.l.b16 %v841
    %v1305 = vunpack.c.h.b16 %v841
    %v1306 = vunpack.c.l.b16 %v842
    %v1307 = vunpack.c.h.b16 %v842
    %v1308 = vunpack.c.l.b16 %v843
    %v1309 = vunpack.c.l.b16 %v844
    %v1310 = vunpack.c.h.b16 %v844
    %v1311 = vunpack.c.l.b16 %v845
    %v1312 = vunpack.c.h.b16 %v845
    %v1313 = vunpack.c.l.b16 %v846
    %v1314 = vunpack.c.l.b16 %v847
    %v1315 = vunpack.c.h.b16 %v847
    %v1316 = vunpack.c.l.b16 %v848
    %v1317 = vunpack.c.h.b16 %v848
    %v1318 = vunpack.c.l.b16 %v849
    %v1319 = vunpack.c.l.b16 %v850
    %v1320 = vunpack.c.h.b16 %v850
    %v1321 = vunpack.c.l.b16 %v851
    %v1322 = vunpack.c.h.b16 %v851
    %v1323 = vunpack.c.l.b16 %v852
    %v1324 = vunpack.c.l.b16 %v853
    %v1325 = vunpack.c.h.b16 %v853
    %v1326 = vunpack.c.l.b16 %v854
    %v1327 = vunpack.c.h.b16 %v854
    %v1328 = vunpack.c.l.b16 %v855
    %v1329 = vunpack.c.l.b16 %v856
    %v1330 = vunpack.c.h.b16 %v856
    %v1331 = vunpack.c.l.b16 %v857
    %v1332 = vunpack.c.h.b16 %v857
    %v1333 = vunpack.c.l.b16 %v858
    %v1334 = vunpack.c.l.b16 %v859
    %v1335 = vunpack.c.h.b16 %v859
    %v1336 = vunpack.c.l.b16 %v860
    %v1337 = vunpack.c.h.b16 %v860
    %v1338 = vunpack.c.l.b16 %v861
    %v1339 = vunpack.c.l.b16 %v862
    %v1340 = vunpack.c.h.b16 %v862
    %v1341 = vunpack.c.l.b16 %v863
    %v1342 = vunpack.c.h.b16 %v863
    %v1343 = vunpack.c.l.b16 %v864
    %v1344 = vunpack.c.l.b16 %v865
    %v1345 = vunpack.c.h.b16 %v865
    %v1346 = vunpack.c.l.b16 %v866
    %v1347 = vunpack.c.h.b16 %v866
    %v1348 = vunpack.c.l.b16 %v867
    %v1349 = vunpack.c.l.b16 %v868
    %v1350 = vunpack.c.h.b16 %v868
    %v1351 = vunpack.c.l.b16 %v869
    %v1352 = vunpack.c.h.b16 %v869
    %v1353 = vunpack.c.l.b16 %v870
    %v1354 = vunpack.c.l.b16 %v871
    %v1355 = vunpack.c.h.b16 %v871
    %v1356 = vunpack.c.l.b16 %v872
    %v1357 = vunpack.c.h.b16 %v872
    %v1358 = vunpack.c.l.b16 %v873
    %v1359 = vunpack.c.l.b16 %v874
    %v1360 = vunpack.c.h.b16 %v874
    %v1361 = vunpack.c.l.b16 %v875
    %v1362 = vunpack.c.h.b16 %v875
    %v1363 = vunpack.c.l.b16 %v876
    %v1364 = vunpack.c.l.b16 %v877
    %v1365 = vunpack.c.h.b16 %v877
    %v1366 = vunpack.c.l.b16 %v878
    %v1367 = vunpack.c.h.b16 %v878
    %v1368 = vunpack.c.l.b16 %v879
    %v1369 = vunpack.c.l.b16 %v880
    %v1370 = vunpack.c.h.b16 %v880
    %v1371 = vunpack.c.l.b16 %v881
    %v1372 = vunpack.c.h.b16 %v881
    %v1373 = vunpack.c.l.b16 %v882
    %v1374 = vunpack.c.l.b16 %v883
    %v1375 = vunpack.c.h.b16 %v883
    %v1376 = vunpack.c.l.b16 %v884
    %v1377 = vunpack.c.h.b16 %v884
    %v1378 = vunpack.c.l.b16 %v885
    %v1379 = vunpack.c.l.b16 %v886
    %v1380 = vunpack.c.h.b16 %v886
    %v1381 = vunpack.c.l.b16 %v887
    %v1382 = vunpack.c.h.b16 %v887
    %v1383 = vunpack.c.l.b16 %v888
    %v1384 = vunpack.c.l.b16 %v889
    %v1385 = vunpack.c.h.b16 %v889
    %v1386 = vunpack.c.l.b16 %v890
    %v1387 = vunpack.c.h.b16 %v890
    %v1388 = vunpack.c.l.b16 %v891
    %v1389 = vunpack.c.l.b16 %v892
    %v1390 = vunpack.c.h.b16 %v892
    %v1391 = vunpack.c.l.b16 %v893
    %v1392 = vunpack.c.h.b16 %v893
    %v1393 = vunpack.c.l.b16 %v894
    %v1394 = vunpack.c.l.b16 %v895
    %v1395 = vunpack.c.h.b16 %v895
    %v1396 = vunpack.c.l.b16 %v896
    %v1397 = vunpack.c.h.b16 %v896
    %v1398 = vunpack.c.l.b16 %v897
    %v1399 = vunpack.c.l.b16 %v898
    %v1400 = vunpack.c.h.b16 %v898
    %v1401 = vunpack.c.l.b16 %v899
    %v1402 = vunpack.c.h.b16 %v899
    %v1403 = vunpack.c.l.b16 %v900
    %v1404 = vunpack.c.l.b16 %v901
    %v1405 = vunpack.c.h.b16 %v901
    %v1406 = vunpack.c.l.b16 %v902
    %v1407 = vunpack.c.h.b16 %v902
    %v1408 = vunpack.c.l.b16 %v903
    %v1409 = vunpack.c.l.b16 %v904
    %v1410 = vunpack.c.h.b16 %v904
    %v1411 = vunpack.c.l.b16 %v905
    %v1412 = vunpack.c.h.b16 %v905
    %v1413 = vunpack.c.l.b16 %v906
    %v1414 = vunpack.c.l.b16 %v907
    %v1415 = vunpack.c.h.b16 %v907
    %v1416 = vunpack.c.l.b16 %v908
    %v1417 = vunpack.c.h.b16 %v908
    %v1418 = vunpack.c.l.b16 %v909
    %v1419 = vunpack.c.l.b16 %v910
    %v1420 = vunpack.c.h.b16 %v910
    %v1421 = vunpack.c.l.b16 %v911
    %v1422 = vunpack.c.h.b16 %v911
    %v1423 = vunpack.c.l.b16 %v912
    %v1424 = vunpack.c.l.b16 %v913
    %v1425 = vunpack.c.h.b16 %v913
    %v1426 = vunpack.c.l.b16 %v914
    %v1427 = vunpack.c.h.b16 %v914
    %v1428 = vunpack.c.l.b16 %v915
    %v1429 = vunpack.c.l.b16 %v916
    %v1430 = vunpack.c.h.b16 %v916
    %v1431 = vunpack.c.l.b16 %v917
    %v1432 = vunpack.c.h.b16 %v917
    %v1433 = vunpack.c.l.b16 %v918
    %v1434 = vunpack.c.l.b16 %v919
    %v1435 = vunpack.c.h.b16 %v919
    %v1436 = vunpack.c.l.b16 %v920
    %v1437 = vunpack.c.h.b16 %v920
    %v1438 = vunpack.c.l.b16 %v921
    %v1439 = vunpack.c.l.b16 %v922
    %v1440 = vunpack.c.h.b16 %v922
    %v1441 = vunpack.c.l.b16 %v923
    %v1442 = vunpack.c.h.b16 %v923
    %v1443 = vunpack.c.l.b16 %v924
    %v1444 = vunpack.c.l.b16 %v925
    %v1445 = vunpack.c.h.b16 %v925
    %v1446 = vunpack.c.l.b16 %v926
    %v1447 = vunpack.c.h.b16 %v926
    %v1448 = vunpack.c.l.b16 %v927
    %v1449 = vunpack.c.l.b16 %v928
    %v1450 = vunpack.c.h.b16 %v928
    %v1451 = vunpack.c.l.b16 %v929
    %v1452 = vunpack.c.h.b16 %v929
    %v1453 = vunpack.c.l.b16 %v930
    %v1454 = vunpack.c.l.b16 %v931
    %v1455 = vunpack.c.h.b16 %v931
    %v1456 = vunpack.c.l.b16 %v932
    %v1457 = vunpack.c.h.b16 %v932
    %v1458 = vunpack.c.l.b16 %v933
    %v1459 = vunpack.c.l.b16 %v934
    %v1460 = vunpack.c.h.b16 %v934
    %v1461 = vunpack.c.l.b16 %v935
    %v1462 = vunpack.c.h.b16 %v935
    %v1463 = vunpack.c.l.b16 %v936
    %v1464 = vunpack.c.l.b16 %v937
    %v1465 = vunpack.c.h.b16 %v937
    %v1466 = vunpack.c.l.b16 %v938
    %v1467 = vunpack.c.h.b16 %v938
    %v1468 = vunpack.c.l.b16 %v939
    %v1469 = vunpack.c.l.b16 %v940
    %v1470 = vunpack.c.h.b16 %v940
    %v1471 = vunpack.c.l.b16 %v941
    %v1472 = vunpack.c.h.b16 %v941
    %v1473 = vunpack.c.l.b16 %v942
    %v1474 = vunpack.c.l.b16 %v943
    %v1475 = vunpack.c.h.b16 %v943
    %v1476 = vunpack.c.l.b16 %v944
    %v1477 = vunpack.c.h.b16 %v944
    %v1478 = vunpack.c.l.b16 %v945
    %v1479 = vunpack.c.l.b16 %v946
    %v1480 = vunpack.c.h.b16 %v946
    %v1481 = vunpack.c.l.b16 %v947
    %v1482 = vunpack.c.h.b16 %v947
    %v1483 = vunpack.c.l.b16 %v948
    %v1484 = vunpack.c.l.b16 %v949
    %v1485 = vunpack.c.h.b16 %v949
    %v1486 = vunpack.c.l.b16 %v950
    %v1487 = vunpack.c.h.b16 %v950
    %v1488 = vunpack.c.l.b16 %v951
    %v1489 = vunpack.c.l.b16 %v952
    %v1490 = vunpack.c.h.b16 %v952
    %v1491 = vunpack.c.l.b16 %v953
    %v1492 = vunpack.c.h.b16 %v953
    %v1493 = vunpack.c.l.b16 %v954
    %v1494 = vpack.c.b16 %v1179, %v1174
    %v1495 = vpack.c.b16 %v1180, %v1175
    %v1496 = vpack.c.b16 %v1181, %v1176
    %v1497 = vpack.c.b16 %v1182, %v1177
    %v1498 = vpack.c.b16 %v1183, %v1178
    %v1499 = vpack.c.b16 %v1189, %v1184
    %v1500 = vpack.c.b16 %v1190, %v1185
    %v1501 = vpack.c.b16 %v1191, %v1186
    %v1502 = vpack.c.b16 %v1192, %v1187
    %v1503 = vpack.c.b16 %v1193, %v1188
    %v1504 = vpack.c.b16 %v1199, %v1194
    %v1505 = vpack.c.b16 %v1200, %v1195
    %v1506 = vpack.c.b16 %v1201, %v1196
    %v1507 = vpack.c.b16 %v1202, %v1197
    %v1508 = vpack.c.b16 %v1203, %v1198
    %v1509 = vpack.c.b16 %v1209, %v1204
    %v1510 = vpack.c.b16 %v1210, %v1205
    %v1511 = vpack.c.b16 %v1211, %v1206
    %v1512 = vpack.c.b16 %v1212, %v1207
    %v1513 = vpack.c.b16 %v1213, %v1208
    %v1514 = vpack.c.b16 %v1219, %v1214
    %v1515 = vpack.c.b16 %v1220, %v1215
    %v1516 = vpack.c.b16 %v1221, %v1216
    %v1517 = vpack.c.b16 %v1222, %v1217
    %v1518 = vpack.c.b16 %v1223, %v1218
    %v1519 = vpack.c.b16 %v1229, %v1224
    %v1520 = vpack.c.b16 %v1230, %v1225
    %v1521 = vpack.c.b16 %v1231, %v1226
    %v1522 = vpack.c.b16 %v1232, %v1227
    %v1523 = vpack.c.b16 %v1233, %v1228
    %v1524 = vpack.c.b16 %v1239, %v1234
    %v1525 = vpack.c.b16 %v1240, %v1235
    %v1526 = vpack.c.b16 %v1241, %v1236
    %v1527 = vpack.c.b16 %v1242, %v1237
    %v1528 = vpack.c.b16 %v1243, %v1238
    %v1529 = vpack.c.b16 %v1249, %v1244
    %v1530 = vpack.c.b16 %v1250, %v1245
    %v1531 = vpack.c.b16 %v1251, %v1246
    %v1532 = vpack.c.b16 %v1252, %v1247
    %v1533 = vpack.c.b16 %v1253, %v1248
    %v1534 = vpack.c.b16 %v1259, %v1254
    %v1535 = vpack.c.b16 %v1260, %v1255
    %v1536 = vpack.c.b16 %v1261, %v1256
    %v1537 = vpack.c.b16 %v1262, %v1257
    %v1538 = vpack.c.b16 %v1263, %v1258
    %v1539 = vpack.c.b16 %v1269, %v1264
    %v1540 = vpack.c.b16 %v1270, %v1265
    %v1541 = vpack.c.b16 %v1271, %v1266
    %v1542 = vpack.c.b16 %v1272, %v1267
    %v1543 = vpack.c.b16 %v1273, %v1268
    %v1544 = vpack.c.b16 %v1279, %v1274
    %v1545 = vpack.c.b16 %v1280, %v1275
    %v1546 = vpack.c.b16 %v1281, %v1276
    %v1547 = vpack.c.b16 %v1282, %v1277
    %v1548 = vpack.c.b16 %v1283, %v1278
    %v1549 = vpack.c.b16 %v1289, %v1284
    %v1550 = vpack.c.b16 %v1290, %v1285
    %v1551 = vpack.c.b16 %v1291, %v1286
    %v1552 = vpack.c.b16 %v1292, %v1287
    %v1553 = vpack.c.b16 %v1293, %v1288
    %v1554 = vpack.c.b16 %v1299, %v1294
    %v1555 = vpack.c.b16 %v1300, %v1295
    %v1556 = vpack.c.b16 %v1301, %v1296
    %v1557 = vpack.c.b16 %v1302, %v1297
    %v1558 = vpack.c.b16 %v1303, %v1298
    %v1559 = vpack.c.b16 %v1309, %v1304
    %v1560 = vpack.c.b16 %v1310, %v1305
    %v1561 = vpack.c.b16 %v1311, %v1306
    %v1562 = vpack.c.b16 %v1312, %v1307
    %v1563 = vpack.c.b16 %v1313, %v1308
    %v1564 = vpack.c.b16 %v1319, %v1314
    %v1565 = vpack.c.b16 %v1320, %v1315
    %v1566 = vpack.c.b16 %v1321, %v1316
    %v1567 = vpack.c.b16 %v1322, %v1317
    %v1568 = vpack.c.b16 %v1323, %v1318
    %v1569 = vpack.c.b16 %v1329, %v1324
    %v1570 = vpack.c.b16 %v1330, %v1325
    %v1571 = vpack.c.b16 %v1331, %v1326
    %v1572 = vpack.c.b16 %v1332, %v1327
    %v1573 = vpack.c.b16 %v1333, %v1328
    %v1574 = vpack.c.b16 %v1339, %v1334
    %v1575 = vpack.c.b16 %v1340, %v1335
    %v1576 = vpack.c.b16 %v1341, %v1336
    %v1577 = vpack.c.b16 %v1342, %v1337
    %v1578 = vpack.c.b16 %v1343, %v1338
    %v1579 = vpack.c.b16 %v1349, %v1344
    %v1580 = vpack.c.b16 %v1350, %v1345
    %v1581 = vpack.c.b16 %v1351, %v1346
    %v1582 = vpack.c.b16 %v1352, %v1347
    %v1583 = vpack.c.b16 %v1353, %v1348
    %v1584 = vpack.c.b16 %v1359, %v1354
    %v1585 = vpack.c.b16 %v1360, %v1355
    %v1586 = vpack.c.b16 %v1361, %v1356
    %v1587 = vpack.c.b16 %v1362, %v1357
    %v1588 = vpack.c.b16 %v1363, %v1358
    %v1589 = vpack.c.b16 %v1369, %v1364
    %v1590 = vpack.c.b16 %v1370, %v1365
    %v1591 = vpack.c.b16 %v1371, %v1366
    %v1592 = vpack.c.b16 %v1372, %v1367
    %v1593 = vpack.c.b16 %v1373, %v1368
    %v1594 = vpack.c.b16 %v1379, %v1374
    %v1595 = vpack.c.b16 %v1380, %v1375
    %v1596 = vpack.c.b16 %v1381, %v1376
    %v1597 = vpack.c.b16 %v1382, %v1377
    %v1598 = vpack.c.b16 %v1383, %v1378
    %v1599 = vpack.c.b16 %v1389, %v1384
    %v1600 = vpack.c.b16 %v1390, %v1385
    %v1601 = vpack.c.b16 %v1391, %v1386
    %v1602 = vpack.c.b16 %v1392, %v1387
    %v1603 = vpack.c.b16 %v1393, %v1388
    %v1604 = vpack.c.b16 %v1399, %v1394
    %v1605 = vpack.c.b16 %v1400, %v1395
    %v1606 = vpack.c.b16 %v1401, %v1396
    %v1607 = vpack.c.b16 %v1402, %v1397
    %v1608 = vpack.c.b16 %v1403, %v1398
    %v1609 = vpack.c.b16 %v1409, %v1404
    %v1610 = vpack.c.b16 %v1410, %v1405
    %v1611 = vpack.c.b16 %v1411, %v1406
    %v1612 = vpack.c.b16 %v1412, %v1407
    %v1613 = vpack.c.b16 %v1413, %v1408
    %v1614 = vpack.c.b16 %v1419, %v1414
    %v1615 = vpack.c.b16 %v1420, %v1415
    %v1616 = vpack.c.b16 %v1421, %v1416
    %v1617 = vpack.c.b16 %v1422, %v1417
    %v1618 = vpack.c.b16 %v1423, %v1418
    %v1619 = vpack.c.b16 %v1429, %v1424
    %v1620 = vpack.c.b16 %v1430, %v1425
    %v1621 = vpack.c.b16 %v1431, %v1426
    %v1622 = vpack.c.b16 %v1432, %v1427
    %v1623 = vpack.c.b16 %v1433, %v1428
    %v1624 = vpack.c.b16 %v1439, %v1434
    %v1625 = vpack.c.b16 %v1440, %v1435
    %v1626 = vpack.c.b16 %v1441, %v1436
    %v1627 = vpack.c.b16 %v1442, %v1437
    %v1628 = vpack.c.b16 %v1443, %v1438
    %v1629 = vpack.c.b16 %v1449, %v1444
    %v1630 = vpack.c.b16 %v1450, %v1445
    %v1631 = vpack.c.b16 %v1451, %v1446
    %v1632 = vpack.c.b16 %v1452, %v1447
    %v1633 = vpack.c.b16 %v1453, %v1448
    %v1634 = vpack.c.b16 %v1459, %v1454
    %v1635 = vpack.c.b16 %v1460, %v1455
    %v1636 = vpack.c.b16 %v1461, %v1456
    %v1637 = vpack.c.b16 %v1462, %v1457
    %v1638 = vpack.c.b16 %v1463, %v1458
    %v1639 = vpack.c.b16 %v1469, %v1464
    %v1640 = vpack.c.b16 %v1470, %v1465
    %v1641 = vpack.c.b16 %v1471, %v1466
    %v1642 = vpack.c.b16 %v1472, %v1467
    %v1643 = vpack.c.b16 %v1473, %v1468
    %v1644 = vpack.c.b16 %v1479, %v1474
    %v1645 = vpack.c.b16 %v1480, %v1475
    %v1646 = vpack.c.b16 %v1481, %v1476
    %v1647 = vpack.c.b16 %v1482, %v1477
    %v1648 = vpack.c.b16 %v1483, %v1478
    %v1649 = vpack.c.b16 %v1489, %v1484
    %v1650 = vpack.c.b16 %v1490, %v1485
    %v1651 = vpack.c.b16 %v1491, %v1486
    %v1652 = vpack.c.b16 %v1492, %v1487
    %v1653 = vpack.c.b16 %v1493, %v1488
    %1814 = vmatprep.subr.bf16.mxu0 %v1530
    %1815 = vmatpush1.bf16.msra.mxu0 %v1529
    %1816 = vmatprep.subr.bf16.mxu0 %v1525
    %1817 = vmatpush1.bf16.msra.mxu0 %v1524
    %1818 = vmatprep.subr.bf16.mxu0 %v1520
    %1819 = vmatpush1.bf16.msra.mxu0 %v1519
    %1820 = vmatprep.subr.bf16.mxu0 %v1515
    %1821 = vmatpush1.bf16.msra.mxu0 %v1514
    %1822 = vmatprep.subr.bf16.mxu0 %v1510
    %1823 = vmatpush1.bf16.msra.mxu0 %v1509
    %1824 = vmatprep.subr.bf16.mxu0 %v1505
    %1825 = vmatpush1.bf16.msra.mxu0 %v1504
    %1826 = vmatprep.subr.bf16.mxu0 %v1500
    %1827 = vmatpush1.bf16.msra.mxu0 %v1499
    %1828 = vmatprep.subr.bf16.mxu0 %v1495
    %1829 = vmatpush1.bf16.msra.mxu0 %v1494
    %1830 = vmatprep.subr.bf16.mxu0 %v1570
    %1831 = vmatpush2.bf16.msra.mxu0 %v1569
    %1832 = vmatprep.subr.bf16.mxu0 %v1565
    %1833 = vmatpush2.bf16.msra.mxu0 %v1564
    %1834 = vmatprep.subr.bf16.mxu0 %v1560
    %1835 = vmatpush2.bf16.msra.mxu0 %v1559
    %1836 = vmatprep.subr.bf16.mxu0 %v1555
    %1837 = vmatpush2.bf16.msra.mxu0 %v1554
    %1838 = vmatprep.subr.bf16.mxu0 %v1550
    %1839 = vmatpush2.bf16.msra.mxu0 %v1549
    %1840 = vmatprep.subr.bf16.mxu0 %v1545
    %1841 = vmatpush2.bf16.msra.mxu0 %v1544
    %1842 = vmatprep.subr.bf16.mxu0 %v1540
    %1843 = vmatpush2.bf16.msra.mxu0 %v1539
    %1844 = vmatprep.subr.bf16.mxu0 %v1535
    %1845 = vmatpush2.bf16.msra.mxu0 %v1534
    %1846 = vmatprep.mubr.bf16.mxu0 %v760
    %1847 = vmatmul.mubr.bf16.gmra.mxu0 %v759
    %v1848 = vpop.f32.mrf.mxu0
    %v1849 = vadd.f32 %v960, %v1848
    %v1850 = vpop.f32.mrf.mxu0
    %v1851 = vadd.f32 %v964, %v1850
    %v1852 = vpop.f32.mrf.mxu0
    %v1853 = vpop.f32.mrf.mxu0
    %1854 = vdwg.mxu0
    %1855 = vmatprep.subr.bf16.mxu0 %v1610
    %1856 = vmatpush1.bf16.msra.mxu0 %v1609
    %1857 = vmatprep.subr.bf16.mxu0 %v1605
    %1858 = vmatpush1.bf16.msra.mxu0 %v1604
    %1859 = vmatprep.subr.bf16.mxu0 %v1600
    %1860 = vmatpush1.bf16.msra.mxu0 %v1599
    %1861 = vmatprep.subr.bf16.mxu0 %v1595
    %1862 = vmatpush1.bf16.msra.mxu0 %v1594
    %1863 = vmatprep.subr.bf16.mxu0 %v1590
    %1864 = vmatpush1.bf16.msra.mxu0 %v1589
    %1865 = vmatprep.subr.bf16.mxu0 %v1585
    %1866 = vmatpush1.bf16.msra.mxu0 %v1584
    %1867 = vmatprep.subr.bf16.mxu0 %v1580
    %1868 = vmatpush1.bf16.msra.mxu0 %v1579
    %1869 = vmatprep.subr.bf16.mxu0 %v1575
    %1870 = vmatpush1.bf16.msra.mxu0 %v1574
    %1871 = vmatprep.subr.bf16.mxu0 %v1650
    %1872 = vmatpush2.bf16.msra.mxu0 %v1649
    %1873 = vmatprep.subr.bf16.mxu0 %v1645
    %1874 = vmatpush2.bf16.msra.mxu0 %v1644
    %1875 = vmatprep.subr.bf16.mxu0 %v1640
    %1876 = vmatpush2.bf16.msra.mxu0 %v1639
    %1877 = vmatprep.subr.bf16.mxu0 %v1635
    %1878 = vmatpush2.bf16.msra.mxu0 %v1634
    %1879 = vmatprep.subr.bf16.mxu0 %v1630
    %1880 = vmatpush2.bf16.msra.mxu0 %v1629
    %1881 = vmatprep.subr.bf16.mxu0 %v1625
    %1882 = vmatpush2.bf16.msra.mxu0 %v1624
    %1883 = vmatprep.subr.bf16.mxu0 %v1620
    %1884 = vmatpush2.bf16.msra.mxu0 %v1619
    %1885 = vmatprep.subr.bf16.mxu0 %v1615
    %1886 = vmatpush2.bf16.msra.mxu0 %v1614
    %1887 = vmatprep.mubr.bf16.mxu0 %v762
    %1888 = vmatmul.mubr.bf16.gmra.mxu0 %v761
    %v1889 = vpop.f32.mrf.mxu0
    %v1890 = vadd.f32 %v1849, %v1889
    %v1891 = vpop.f32.mrf.mxu0
    %v1892 = vadd.f32 %v1851, %v1891
    %v1893 = vpop.f32.mrf.mxu0
    %v1894 = vpop.f32.mrf.mxu0
    %1895 = vdwg.mxu0
    %1896 = vmatprep.subr.bf16.mxu0 %v1532
    %1897 = vmatpush1.bf16.msra.mxu0 %v1531
    %1898 = vmatprep.subr.bf16.mxu0 %v1527
    %1899 = vmatpush1.bf16.msra.mxu0 %v1526
    %1900 = vmatprep.subr.bf16.mxu0 %v1522
    %1901 = vmatpush1.bf16.msra.mxu0 %v1521
    %1902 = vmatprep.subr.bf16.mxu0 %v1517
    %1903 = vmatpush1.bf16.msra.mxu0 %v1516
    %1904 = vmatprep.subr.bf16.mxu0 %v1512
    %1905 = vmatpush1.bf16.msra.mxu0 %v1511
    %1906 = vmatprep.subr.bf16.mxu0 %v1507
    %1907 = vmatpush1.bf16.msra.mxu0 %v1506
    %1908 = vmatprep.subr.bf16.mxu0 %v1502
    %1909 = vmatpush1.bf16.msra.mxu0 %v1501
    %1910 = vmatprep.subr.bf16.mxu0 %v1497
    %1911 = vmatpush1.bf16.msra.mxu0 %v1496
    %1912 = vmatprep.subr.bf16.mxu0 %v1572
    %1913 = vmatpush2.bf16.msra.mxu0 %v1571
    %1914 = vmatprep.subr.bf16.mxu0 %v1567
    %1915 = vmatpush2.bf16.msra.mxu0 %v1566
    %1916 = vmatprep.subr.bf16.mxu0 %v1562
    %1917 = vmatpush2.bf16.msra.mxu0 %v1561
    %1918 = vmatprep.subr.bf16.mxu0 %v1557
    %1919 = vmatpush2.bf16.msra.mxu0 %v1556
    %1920 = vmatprep.subr.bf16.mxu0 %v1552
    %1921 = vmatpush2.bf16.msra.mxu0 %v1551
    %1922 = vmatprep.subr.bf16.mxu0 %v1547
    %1923 = vmatpush2.bf16.msra.mxu0 %v1546
    %1924 = vmatprep.subr.bf16.mxu0 %v1542
    %1925 = vmatpush2.bf16.msra.mxu0 %v1541
    %1926 = vmatprep.subr.bf16.mxu0 %v1537
    %1927 = vmatpush2.bf16.msra.mxu0 %v1536
    %1928 = vmatprep.mubr.bf16.mxu0 %v760
    %1929 = vmatmul.mubr.bf16.gmra.mxu0 %v759
    %v1930 = vpop.f32.mrf.mxu0
    %v1931 = vadd.f32 %v968, %v1930
    %v1932 = vpop.f32.mrf.mxu0
    %v1933 = vadd.f32 %v972, %v1932
    %v1934 = vpop.f32.mrf.mxu0
    %v1935 = vpop.f32.mrf.mxu0
    %1936 = vdwg.mxu0
    %1937 = vmatprep.subr.bf16.mxu0 %v1612
    %1938 = vmatpush1.bf16.msra.mxu0 %v1611
    %1939 = vmatprep.subr.bf16.mxu0 %v1607
    %1940 = vmatpush1.bf16.msra.mxu0 %v1606
    %1941 = vmatprep.subr.bf16.mxu0 %v1602
    %1942 = vmatpush1.bf16.msra.mxu0 %v1601
    %1943 = vmatprep.subr.bf16.mxu0 %v1597
    %1944 = vmatpush1.bf16.msra.mxu0 %v1596
    %1945 = vmatprep.subr.bf16.mxu0 %v1592
    %1946 = vmatpush1.bf16.msra.mxu0 %v1591
    %1947 = vmatprep.subr.bf16.mxu0 %v1587
    %1948 = vmatpush1.bf16.msra.mxu0 %v1586
    %1949 = vmatprep.subr.bf16.mxu0 %v1582
    %1950 = vmatpush1.bf16.msra.mxu0 %v1581
    %1951 = vmatprep.subr.bf16.mxu0 %v1577
    %1952 = vmatpush1.bf16.msra.mxu0 %v1576
    %1953 = vmatprep.subr.bf16.mxu0 %v1652
    %1954 = vmatpush2.bf16.msra.mxu0 %v1651
    %1955 = vmatprep.subr.bf16.mxu0 %v1647
    %1956 = vmatpush2.bf16.msra.mxu0 %v1646
    %1957 = vmatprep.subr.bf16.mxu0 %v1642
    %1958 = vmatpush2.bf16.msra.mxu0 %v1641
    %1959 = vmatprep.subr.bf16.mxu0 %v1637
    %1960 = vmatpush2.bf16.msra.mxu0 %v1636
    %1961 = vmatprep.subr.bf16.mxu0 %v1632
    %1962 = vmatpush2.bf16.msra.mxu0 %v1631
    %1963 = vmatprep.subr.bf16.mxu0 %v1627
    %1964 = vmatpush2.bf16.msra.mxu0 %v1626
    %1965 = vmatprep.subr.bf16.mxu0 %v1622
    %1966 = vmatpush2.bf16.msra.mxu0 %v1621
    %1967 = vmatprep.subr.bf16.mxu0 %v1617
    %1968 = vmatpush2.bf16.msra.mxu0 %v1616
    %1969 = vmatprep.mubr.bf16.mxu0 %v762
    %1970 = vmatmul.mubr.bf16.gmra.mxu0 %v761
    %v1971 = vpop.f32.mrf.mxu0
    %v1972 = vadd.f32 %v1931, %v1971
    %v1973 = vpop.f32.mrf.mxu0
    %v1974 = vadd.f32 %v1933, %v1973
    %v1975 = vpop.f32.mrf.mxu0
    %v1976 = vpop.f32.mrf.mxu0
    %1977 = vdwg.mxu0
    %1978 = vmatprep.subr.bf16.mxu0 0
    %1979 = vmatpush1.bf16.msra.mxu0 %v1533
    %1980 = vmatprep.subr.bf16.mxu0 0
    %1981 = vmatpush1.bf16.msra.mxu0 %v1528
    %1982 = vmatprep.subr.bf16.mxu0 0
    %1983 = vmatpush1.bf16.msra.mxu0 %v1523
    %1984 = vmatprep.subr.bf16.mxu0 0
    %1985 = vmatpush1.bf16.msra.mxu0 %v1518
    %1986 = vmatprep.subr.bf16.mxu0 0
    %1987 = vmatpush1.bf16.msra.mxu0 %v1513
    %1988 = vmatprep.subr.bf16.mxu0 0
    %1989 = vmatpush1.bf16.msra.mxu0 %v1508
    %1990 = vmatprep.subr.bf16.mxu0 0
    %1991 = vmatpush1.bf16.msra.mxu0 %v1503
    %1992 = vmatprep.subr.bf16.mxu0 0
    %1993 = vmatpush1.bf16.msra.mxu0 %v1498
    %1994 = vmatprep.subr.bf16.mxu0 0
    %1995 = vmatpush2.bf16.msra.mxu0 %v1573
    %1996 = vmatprep.subr.bf16.mxu0 0
    %1997 = vmatpush2.bf16.msra.mxu0 %v1568
    %1998 = vmatprep.subr.bf16.mxu0 0
    %1999 = vmatpush2.bf16.msra.mxu0 %v1563
    %2000 = vmatprep.subr.bf16.mxu0 0
    %2001 = vmatpush2.bf16.msra.mxu0 %v1558
    %2002 = vmatprep.subr.bf16.mxu0 0
    %2003 = vmatpush2.bf16.msra.mxu0 %v1553
    %2004 = vmatprep.subr.bf16.mxu0 0
    %2005 = vmatpush2.bf16.msra.mxu0 %v1548
    %2006 = vmatprep.subr.bf16.mxu0 0
    %2007 = vmatpush2.bf16.msra.mxu0 %v1543
    %2008 = vmatprep.subr.bf16.mxu0 0
    %2009 = vmatpush2.bf16.msra.mxu0 %v1538
    %2010 = vmatprep.mubr.bf16.mxu0 %v760
    %2011 = vmatmul.mubr.bf16.gmra.mxu0 %v759
    %v2012 = vpop.f32.mrf.mxu0
    %v2013 = vadd.f32 %v976, %v2012
    %v2014 = vpop.f32.mrf.mxu0
    %v2015 = vpop.f32.mrf.mxu0
    %v2016 = vpop.f32.mrf.mxu0
    %2017 = vdwg.mxu0
    %2018 = vmatprep.subr.bf16.mxu0 0
    %2019 = vmatpush1.bf16.msra.mxu0 %v1613
    %2020 = vmatprep.subr.bf16.mxu0 0
    %2021 = vmatpush1.bf16.msra.mxu0 %v1608
    %2022 = vmatprep.subr.bf16.mxu0 0
    %2023 = vmatpush1.bf16.msra.mxu0 %v1603
    %2024 = vmatprep.subr.bf16.mxu0 0
    %2025 = vmatpush1.bf16.msra.mxu0 %v1598
    %2026 = vmatprep.subr.bf16.mxu0 0
    %2027 = vmatpush1.bf16.msra.mxu0 %v1593
    %2028 = vmatprep.subr.bf16.mxu0 0
    %2029 = vmatpush1.bf16.msra.mxu0 %v1588
    %2030 = vmatprep.subr.bf16.mxu0 0
    %2031 = vmatpush1.bf16.msra.mxu0 %v1583
    %2032 = vmatprep.subr.bf16.mxu0 0
    %2033 = vmatpush1.bf16.msra.mxu0 %v1578
    %2034 = vmatprep.subr.bf16.mxu0 0
    %2035 = vmatpush2.bf16.msra.mxu0 %v1653
    %2036 = vmatprep.subr.bf16.mxu0 0
    %2037 = vmatpush2.bf16.msra.mxu0 %v1648
    %2038 = vmatprep.subr.bf16.mxu0 0
    %2039 = vmatpush2.bf16.msra.mxu0 %v1643
    %2040 = vmatprep.subr.bf16.mxu0 0
    %2041 = vmatpush2.bf16.msra.mxu0 %v1638
    %2042 = vmatprep.subr.bf16.mxu0 0
    %2043 = vmatpush2.bf16.msra.mxu0 %v1633
    %2044 = vmatprep.subr.bf16.mxu0 0
    %2045 = vmatpush2.bf16.msra.mxu0 %v1628
    %2046 = vmatprep.subr.bf16.mxu0 0
    %2047 = vmatpush2.bf16.msra.mxu0 %v1623
    %2048 = vmatprep.subr.bf16.mxu0 0
    %2049 = vmatpush2.bf16.msra.mxu0 %v1618
    %2050 = vmatprep.mubr.bf16.mxu0 %v762
    %2051 = vmatmul.mubr.bf16.gmra.mxu0 %v761
    %v2052 = vpop.f32.mrf.mxu0
    %v2053 = vadd.f32 %v2013, %v2052
    %v2054 = vpop.f32.mrf.mxu0
    %v2055 = vpop.f32.mrf.mxu0
    %v2056 = vpop.f32.mrf.mxu0
    %2057 = vdwg.mxu0
    %v2058 = vmax.f32 %v1890, 0.0
    %v2059 = vmax.f32 %v1892, 0.0
    %v2060 = vmax.f32 %v1972, 0.0
    %v2061 = vmax.f32 %v1974, 0.0
    %v2062 = vmax.f32 %v2053, 0.0
    %v2063 = vpack.c.bf16 %v2058, %v2058
    %v2064 = vpack.c.bf16 %v2059, %v2059
    %v2065 = vpack.c.bf16 %v2060, %v2060
    %v2066 = vpack.c.bf16 %v2061, %v2061
    %v2067 = vpack.c.bf16 %v2062, %v2062
    %v2068 = vld [vmem:[#allocation11] sm:$0xff]
    %v2069 = vld [vmem:[#allocation11 + $0x8] sm:$0xff]
    %v2070 = vld [vmem:[#allocation11 + $0x10] sm:$0xff]
    %v2071 = vld [vmem:[#allocation11 + $0x18] sm:$0xff]
    %v2072 = vld [vmem:[#allocation11 + $0x20] sm:$0xff]
    %v2073 = vld [vmem:[#allocation11 + $0x28] sm:$0xff]
    %v2074 = vld [vmem:[#allocation11 + $0x30] sm:$0xff]
    %v2075 = vld [vmem:[#allocation11 + $0x38] sm:$0xff]
    %v2076 = vld [vmem:[#allocation11 + $0x40] sm:$0xff]
    %v2077 = vld [vmem:[#allocation11 + $0x48] sm:$0xff]
    %v2078 = vld [vmem:[#allocation11 + $0x50] sm:$0xff]
    %v2079 = vld [vmem:[#allocation11 + $0x58] sm:$0xff]
    %v2080 = vld [vmem:[#allocation11 + $0x60] sm:$0xff]
    %v2081 = vld [vmem:[#allocation11 + $0x68] sm:$0xff]
    %v2082 = vld [vmem:[#allocation11 + $0x70] sm:$0xff]
    %v2083 = vld [vmem:[#allocation11 + $0x78] sm:$0xff]
    %v2084 = vld [vmem:[#allocation11 + $0x80] sm:$0xff]
    %v2085 = vld [vmem:[#allocation11 + $0x88] sm:$0xff]
    %v2086 = vld [vmem:[#allocation11 + $0x90] sm:$0xff]
    %v2087 = vld [vmem:[#allocation11 + $0x98] sm:$0xff]
    %v2088 = vld [vmem:[#allocation11 + $0xa0] sm:$0xff]
    %v2089 = vld [vmem:[#allocation11 + $0xa8] sm:$0xff]
    %v2090 = vld [vmem:[#allocation11 + $0xb0] sm:$0xff]
    %v2091 = vld [vmem:[#allocation11 + $0xb8] sm:$0xff]
    %v2092 = vld [vmem:[#allocation11 + $0xc0] sm:$0xff]
    %v2093 = vld [vmem:[#allocation11 + $0xc8] sm:$0xff]
    %v2094 = vld [vmem:[#allocation11 + $0xd0] sm:$0xff]
    %v2095 = vld [vmem:[#allocation11 + $0xd8] sm:$0xff]
    %v2096 = vld [vmem:[#allocation11 + $0xe0] sm:$0xff]
    %v2097 = vld [vmem:[#allocation11 + $0xe8] sm:$0xff]
    %v2098 = vld [vmem:[#allocation11 + $0xf0] sm:$0xff]
    %v2099 = vld [vmem:[#allocation11 + $0xf8] sm:$0xff]
    %v2100 = vld [vmem:[#allocation11 + $0x100] sm:$0xff]
    %v2101 = vld [vmem:[#allocation11 + $0x108] sm:$0xff]
    %v2102 = vld [vmem:[#allocation11 + $0x110] sm:$0xff]
    %v2103 = vld [vmem:[#allocation11 + $0x118] sm:$0xff]
    %v2104 = vld [vmem:[#allocation11 + $0x120] sm:$0xff]
    %v2105 = vld [vmem:[#allocation11 + $0x128] sm:$0xff]
    %v2106 = vld [vmem:[#allocation11 + $0x130] sm:$0xff]
    %v2107 = vld [vmem:[#allocation11 + $0x138] sm:$0xff]
    %v2108 = vld [vmem:[#allocation11 + $0x140] sm:$0xff]
    %v2109 = vld [vmem:[#allocation11 + $0x148] sm:$0xff]
    %v2110 = vld [vmem:[#allocation11 + $0x150] sm:$0xff]
    %v2111 = vld [vmem:[#allocation11 + $0x158] sm:$0xff]
    %v2112 = vld [vmem:[#allocation11 + $0x160] sm:$0xff]
    %v2113 = vld [vmem:[#allocation11 + $0x168] sm:$0xff]
    %v2114 = vld [vmem:[#allocation11 + $0x170] sm:$0xff]
    %v2115 = vld [vmem:[#allocation11 + $0x178] sm:$0xff]
    %v2116 = vld [vmem:[#allocation11 + $0x180] sm:$0xff]
    %v2117 = vld [vmem:[#allocation11 + $0x188] sm:$0xff]
    %v2118 = vld [vmem:[#allocation11 + $0x190] sm:$0xff]
    %v2119 = vld [vmem:[#allocation11 + $0x198] sm:$0xff]
    %v2120 = vld [vmem:[#allocation11 + $0x1a0] sm:$0xff]
    %v2121 = vld [vmem:[#allocation11 + $0x1a8] sm:$0xff]
    %v2122 = vld [vmem:[#allocation11 + $0x1b0] sm:$0xff]
    %v2123 = vld [vmem:[#allocation11 + $0x1b8] sm:$0xff]
    %v2124 = vld [vmem:[#allocation11 + $0x1c0] sm:$0xff]
    %v2125 = vld [vmem:[#allocation11 + $0x1c8] sm:$0xff]
    %v2126 = vld [vmem:[#allocation11 + $0x1d0] sm:$0xff]
    %v2127 = vld [vmem:[#allocation11 + $0x1d8] sm:$0xff]
    %v2128 = vld [vmem:[#allocation11 + $0x1e0] sm:$0xff]
    %v2129 = vld [vmem:[#allocation11 + $0x1e8] sm:$0xff]
    %v2130 = vld [vmem:[#allocation11 + $0x1f0] sm:$0xff]
    %v2131 = vld [vmem:[#allocation11 + $0x1f8] sm:$0xff]
    %v2132 = vld [vmem:[#allocation11 + $0x200] sm:$0xff]
    %v2133 = vld [vmem:[#allocation11 + $0x208] sm:$0xff]
    %v2134 = vld [vmem:[#allocation11 + $0x210] sm:$0xff]
    %v2135 = vld [vmem:[#allocation11 + $0x218] sm:$0xff]
    %v2136 = vld [vmem:[#allocation11 + $0x220] sm:$0xff]
    %v2137 = vld [vmem:[#allocation11 + $0x228] sm:$0xff]
    %v2138 = vld [vmem:[#allocation11 + $0x230] sm:$0xff]
    %v2139 = vld [vmem:[#allocation11 + $0x238] sm:$0xff]
    %v2140 = vld [vmem:[#allocation11 + $0x240] sm:$0xff]
    %v2141 = vld [vmem:[#allocation11 + $0x248] sm:$0xff]
    %v2142 = vld [vmem:[#allocation11 + $0x250] sm:$0xff]
    %v2143 = vld [vmem:[#allocation11 + $0x258] sm:$0xff]
    %v2144 = vld [vmem:[#allocation11 + $0x260] sm:$0xff]
    %v2145 = vld [vmem:[#allocation11 + $0x268] sm:$0xff]
    %v2146 = vld [vmem:[#allocation11 + $0x270] sm:$0xff]
    %v2147 = vld [vmem:[#allocation11 + $0x278] sm:$0xff]
    %v2148 = vld [vmem:[#allocation11 + $0x280] sm:$0xff]
    %v2149 = vld [vmem:[#allocation11 + $0x288] sm:$0xff]
    %v2150 = vld [vmem:[#allocation11 + $0x290] sm:$0xff]
    %v2151 = vld [vmem:[#allocation11 + $0x298] sm:$0xff]
    %v2152 = vld [vmem:[#allocation11 + $0x2a0] sm:$0xff]
    %v2153 = vld [vmem:[#allocation11 + $0x2a8] sm:$0xff]
    %v2154 = vld [vmem:[#allocation11 + $0x2b0] sm:$0xff]
    %v2155 = vld [vmem:[#allocation11 + $0x2b8] sm:$0xff]
    %v2156 = vld [vmem:[#allocation11 + $0x2c0] sm:$0xff]
    %v2157 = vld [vmem:[#allocation11 + $0x2c8] sm:$0xff]
    %v2158 = vld [vmem:[#allocation11 + $0x2d0] sm:$0xff]
    %v2159 = vld [vmem:[#allocation11 + $0x2d8] sm:$0xff]
    %v2160 = vld [vmem:[#allocation11 + $0x2e0] sm:$0xff]
    %v2161 = vld [vmem:[#allocation11 + $0x2e8] sm:$0xff]
    %v2162 = vld [vmem:[#allocation11 + $0x2f0] sm:$0xff]
    %v2163 = vld [vmem:[#allocation11 + $0x2f8] sm:$0xff]
    %v2164 = vld [vmem:[#allocation11 + $0x300] sm:$0xff]
    %v2165 = vld [vmem:[#allocation11 + $0x308] sm:$0xff]
    %v2166 = vld [vmem:[#allocation11 + $0x310] sm:$0xff]
    %v2167 = vld [vmem:[#allocation11 + $0x318] sm:$0xff]
    %v2168 = vld [vmem:[#allocation11 + $0x320] sm:$0xff]
    %v2169 = vld [vmem:[#allocation11 + $0x328] sm:$0xff]
    %v2170 = vld [vmem:[#allocation11 + $0x330] sm:$0xff]
    %v2171 = vld [vmem:[#allocation11 + $0x338] sm:$0xff]
    %v2172 = vld [vmem:[#allocation11 + $0x340] sm:$0xff]
    %v2173 = vld [vmem:[#allocation11 + $0x348] sm:$0xff]
    %v2174 = vld [vmem:[#allocation11 + $0x350] sm:$0xff]
    %v2175 = vld [vmem:[#allocation11 + $0x358] sm:$0xff]
    %v2176 = vld [vmem:[#allocation11 + $0x360] sm:$0xff]
    %v2177 = vld [vmem:[#allocation11 + $0x368] sm:$0xff]
    %v2178 = vld [vmem:[#allocation11 + $0x370] sm:$0xff]
    %v2179 = vld [vmem:[#allocation11 + $0x378] sm:$0xff]
    %v2180 = vld [vmem:[#allocation11 + $0x380] sm:$0xff]
    %v2181 = vld [vmem:[#allocation11 + $0x388] sm:$0xff]
    %v2182 = vld [vmem:[#allocation11 + $0x390] sm:$0xff]
    %v2183 = vld [vmem:[#allocation11 + $0x398] sm:$0xff]
    %v2184 = vld [vmem:[#allocation11 + $0x3a0] sm:$0xff]
    %v2185 = vld [vmem:[#allocation11 + $0x3a8] sm:$0xff]
    %v2186 = vld [vmem:[#allocation11 + $0x3b0] sm:$0xff]
    %v2187 = vld [vmem:[#allocation11 + $0x3b8] sm:$0xff]
    %v2188 = vld [vmem:[#allocation11 + $0x3c0] sm:$0xff]
    %v2189 = vld [vmem:[#allocation11 + $0x3c8] sm:$0xff]
    %v2190 = vld [vmem:[#allocation11 + $0x3d0] sm:$0xff]
    %v2191 = vld [vmem:[#allocation11 + $0x3d8] sm:$0xff]
    %v2192 = vld [vmem:[#allocation11 + $0x3e0] sm:$0xff]
    %v2193 = vld [vmem:[#allocation11 + $0x3e8] sm:$0xff]
    %v2194 = vld [vmem:[#allocation11 + $0x3f0] sm:$0xff]
    %v2195 = vld [vmem:[#allocation11 + $0x3f8] sm:$0xff]
    %v2196 = vld [vmem:[#allocation11 + $0x400] sm:$0xff]
    %v2197 = vld [vmem:[#allocation11 + $0x408] sm:$0xff]
    %v2198 = vld [vmem:[#allocation11 + $0x410] sm:$0xff]
    %v2199 = vld [vmem:[#allocation11 + $0x418] sm:$0xff]
    %v2200 = vld [vmem:[#allocation11 + $0x420] sm:$0xff]
    %v2201 = vld [vmem:[#allocation11 + $0x428] sm:$0xff]
    %v2202 = vld [vmem:[#allocation11 + $0x430] sm:$0xff]
    %v2203 = vld [vmem:[#allocation11 + $0x438] sm:$0xff]
    %v2204 = vld [vmem:[#allocation11 + $0x440] sm:$0xff]
    %v2205 = vld [vmem:[#allocation11 + $0x448] sm:$0xff]
    %v2206 = vld [vmem:[#allocation11 + $0x450] sm:$0xff]
    %v2207 = vld [vmem:[#allocation11 + $0x458] sm:$0xff]
    %v2208 = vld [vmem:[#allocation11 + $0x460] sm:$0xff]
    %v2209 = vld [vmem:[#allocation11 + $0x468] sm:$0xff]
    %v2210 = vld [vmem:[#allocation11 + $0x470] sm:$0xff]
    %v2211 = vld [vmem:[#allocation11 + $0x478] sm:$0xff]
    %v2212 = vld [vmem:[#allocation11 + $0x480] sm:$0xff]
    %v2213 = vld [vmem:[#allocation11 + $0x488] sm:$0xff]
    %v2214 = vld [vmem:[#allocation11 + $0x490] sm:$0xff]
    %v2215 = vld [vmem:[#allocation11 + $0x498] sm:$0xff]
    %v2216 = vld [vmem:[#allocation11 + $0x4a0] sm:$0xff]
    %v2217 = vld [vmem:[#allocation11 + $0x4a8] sm:$0xff]
    %v2218 = vld [vmem:[#allocation11 + $0x4b0] sm:$0xff]
    %v2219 = vld [vmem:[#allocation11 + $0x4b8] sm:$0xff]
    %v2220 = vld [vmem:[#allocation11 + $0x4c0] sm:$0xff]
    %v2221 = vld [vmem:[#allocation11 + $0x4c8] sm:$0xff]
    %v2222 = vld [vmem:[#allocation11 + $0x4d0] sm:$0xff]
    %v2223 = vld [vmem:[#allocation11 + $0x4d8] sm:$0xff]
    %v2224 = vld [vmem:[#allocation11 + $0x4e0] sm:$0xff]
    %v2225 = vld [vmem:[#allocation11 + $0x4e8] sm:$0xff]
    %v2226 = vld [vmem:[#allocation11 + $0x4f0] sm:$0xff]
    %v2227 = vld [vmem:[#allocation11 + $0x4f8] sm:$0xff]
    %v2228 = vld [vmem:[%s8] sm:$0xf]
    %v2230 = vlaneseq
    %v2231 = vshrl.u32 %v2230, 7
    %v2232 = vsub.s32 0, %v2231
    %v2233 = vrot.slane %v2228, %v2232
    %v2234 = vlaneseq
    %v2235 = vshrl.u32 %v2234, 7
    %v2236 = vsub.s32 1, %v2235
    %v2237 = vrot.slane %v2228, %v2236
    %v2238 = vlaneseq
    %v2239 = vshrl.u32 %v2238, 7
    %v2240 = vsub.s32 2, %v2239
    %v2241 = vrot.slane %v2228, %v2240
    %v2242 = vlaneseq
    %v2243 = vshrl.u32 %v2242, 7
    %v2244 = vsub.s32 3, %v2243
    %v2245 = vrot.slane %v2228, %v2244
    %v2410 = vunpack.c.l.b16 %v2068
    %v2411 = vunpack.c.h.b16 %v2068
    %v2412 = vunpack.c.l.b16 %v2069
    %v2413 = vunpack.c.h.b16 %v2069
    %v2414 = vunpack.c.l.b16 %v2070
    %v2415 = vunpack.c.h.b16 %v2070
    %v2416 = vunpack.c.l.b16 %v2071
    %v2417 = vunpack.c.h.b16 %v2071
    %v2418 = vunpack.c.l.b16 %v2072
    %v2419 = vunpack.c.h.b16 %v2072
    %v2420 = vunpack.c.l.b16 %v2073
    %v2421 = vunpack.c.h.b16 %v2073
    %v2422 = vunpack.c.l.b16 %v2074
    %v2423 = vunpack.c.h.b16 %v2074
    %v2424 = vunpack.c.l.b16 %v2075
    %v2425 = vunpack.c.h.b16 %v2075
    %v2426 = vunpack.c.l.b16 %v2076
    %v2427 = vunpack.c.h.b16 %v2076
    %v2428 = vunpack.c.l.b16 %v2077
    %v2429 = vunpack.c.h.b16 %v2077
    %v2430 = vunpack.c.l.b16 %v2078
    %v2431 = vunpack.c.h.b16 %v2078
    %v2432 = vunpack.c.l.b16 %v2079
    %v2433 = vunpack.c.h.b16 %v2079
    %v2434 = vunpack.c.l.b16 %v2080
    %v2435 = vunpack.c.h.b16 %v2080
    %v2436 = vunpack.c.l.b16 %v2081
    %v2437 = vunpack.c.h.b16 %v2081
    %v2438 = vunpack.c.l.b16 %v2082
    %v2439 = vunpack.c.h.b16 %v2082
    %v2440 = vunpack.c.l.b16 %v2083
    %v2441 = vunpack.c.h.b16 %v2083
    %v2442 = vunpack.c.l.b16 %v2084
    %v2443 = vunpack.c.h.b16 %v2084
    %v2444 = vunpack.c.l.b16 %v2085
    %v2445 = vunpack.c.h.b16 %v2085
    %v2446 = vunpack.c.l.b16 %v2086
    %v2447 = vunpack.c.h.b16 %v2086
    %v2448 = vunpack.c.l.b16 %v2087
    %v2449 = vunpack.c.h.b16 %v2087
    %v2450 = vunpack.c.l.b16 %v2088
    %v2451 = vunpack.c.h.b16 %v2088
    %v2452 = vunpack.c.l.b16 %v2089
    %v2453 = vunpack.c.h.b16 %v2089
    %v2454 = vunpack.c.l.b16 %v2090
    %v2455 = vunpack.c.h.b16 %v2090
    %v2456 = vunpack.c.l.b16 %v2091
    %v2457 = vunpack.c.h.b16 %v2091
    %v2458 = vunpack.c.l.b16 %v2092
    %v2459 = vunpack.c.h.b16 %v2092
    %v2460 = vunpack.c.l.b16 %v2093
    %v2461 = vunpack.c.h.b16 %v2093
    %v2462 = vunpack.c.l.b16 %v2094
    %v2463 = vunpack.c.h.b16 %v2094
    %v2464 = vunpack.c.l.b16 %v2095
    %v2465 = vunpack.c.h.b16 %v2095
    %v2466 = vunpack.c.l.b16 %v2096
    %v2467 = vunpack.c.h.b16 %v2096
    %v2468 = vunpack.c.l.b16 %v2097
    %v2469 = vunpack.c.h.b16 %v2097
    %v2470 = vunpack.c.l.b16 %v2098
    %v2471 = vunpack.c.h.b16 %v2098
    %v2472 = vunpack.c.l.b16 %v2099
    %v2473 = vunpack.c.h.b16 %v2099
    %v2474 = vunpack.c.l.b16 %v2100
    %v2475 = vunpack.c.h.b16 %v2100
    %v2476 = vunpack.c.l.b16 %v2101
    %v2477 = vunpack.c.h.b16 %v2101
    %v2478 = vunpack.c.l.b16 %v2102
    %v2479 = vunpack.c.h.b16 %v2102
    %v2480 = vunpack.c.l.b16 %v2103
    %v2481 = vunpack.c.h.b16 %v2103
    %v2482 = vunpack.c.l.b16 %v2104
    %v2483 = vunpack.c.h.b16 %v2104
    %v2484 = vunpack.c.l.b16 %v2105
    %v2485 = vunpack.c.h.b16 %v2105
    %v2486 = vunpack.c.l.b16 %v2106
    %v2487 = vunpack.c.h.b16 %v2106
    %v2488 = vunpack.c.l.b16 %v2107
    %v2489 = vunpack.c.h.b16 %v2107
    %v2490 = vunpack.c.l.b16 %v2108
    %v2491 = vunpack.c.h.b16 %v2108
    %v2492 = vunpack.c.l.b16 %v2109
    %v2493 = vunpack.c.h.b16 %v2109
    %v2494 = vunpack.c.l.b16 %v2110
    %v2495 = vunpack.c.h.b16 %v2110
    %v2496 = vunpack.c.l.b16 %v2111
    %v2497 = vunpack.c.h.b16 %v2111
    %v2498 = vunpack.c.l.b16 %v2112
    %v2499 = vunpack.c.h.b16 %v2112
    %v2500 = vunpack.c.l.b16 %v2113
    %v2501 = vunpack.c.h.b16 %v2113
    %v2502 = vunpack.c.l.b16 %v2114
    %v2503 = vunpack.c.h.b16 %v2114
    %v2504 = vunpack.c.l.b16 %v2115
    %v2505 = vunpack.c.h.b16 %v2115
    %v2506 = vunpack.c.l.b16 %v2116
    %v2507 = vunpack.c.h.b16 %v2116
    %v2508 = vunpack.c.l.b16 %v2117
    %v2509 = vunpack.c.h.b16 %v2117
    %v2510 = vunpack.c.l.b16 %v2118
    %v2511 = vunpack.c.h.b16 %v2118
    %v2512 = vunpack.c.l.b16 %v2119
    %v2513 = vunpack.c.h.b16 %v2119
    %v2514 = vunpack.c.l.b16 %v2120
    %v2515 = vunpack.c.h.b16 %v2120
    %v2516 = vunpack.c.l.b16 %v2121
    %v2517 = vunpack.c.h.b16 %v2121
    %v2518 = vunpack.c.l.b16 %v2122
    %v2519 = vunpack.c.h.b16 %v2122
    %v2520 = vunpack.c.l.b16 %v2123
    %v2521 = vunpack.c.h.b16 %v2123
    %v2522 = vunpack.c.l.b16 %v2124
    %v2523 = vunpack.c.h.b16 %v2124
    %v2524 = vunpack.c.l.b16 %v2125
    %v2525 = vunpack.c.h.b16 %v2125
    %v2526 = vunpack.c.l.b16 %v2126
    %v2527 = vunpack.c.h.b16 %v2126
    %v2528 = vunpack.c.l.b16 %v2127
    %v2529 = vunpack.c.h.b16 %v2127
    %v2530 = vunpack.c.l.b16 %v2128
    %v2531 = vunpack.c.h.b16 %v2128
    %v2532 = vunpack.c.l.b16 %v2129
    %v2533 = vunpack.c.h.b16 %v2129
    %v2534 = vunpack.c.l.b16 %v2130
    %v2535 = vunpack.c.h.b16 %v2130
    %v2536 = vunpack.c.l.b16 %v2131
    %v2537 = vunpack.c.h.b16 %v2131
    %v2538 = vunpack.c.l.b16 %v2132
    %v2539 = vunpack.c.h.b16 %v2132
    %v2540 = vunpack.c.l.b16 %v2133
    %v2541 = vunpack.c.h.b16 %v2133
    %v2542 = vunpack.c.l.b16 %v2134
    %v2543 = vunpack.c.h.b16 %v2134
    %v2544 = vunpack.c.l.b16 %v2135
    %v2545 = vunpack.c.h.b16 %v2135
    %v2546 = vunpack.c.l.b16 %v2136
    %v2547 = vunpack.c.h.b16 %v2136
    %v2548 = vunpack.c.l.b16 %v2137
    %v2549 = vunpack.c.h.b16 %v2137
    %v2550 = vunpack.c.l.b16 %v2138
    %v2551 = vunpack.c.h.b16 %v2138
    %v2552 = vunpack.c.l.b16 %v2139
    %v2553 = vunpack.c.h.b16 %v2139
    %v2554 = vunpack.c.l.b16 %v2140
    %v2555 = vunpack.c.h.b16 %v2140
    %v2556 = vunpack.c.l.b16 %v2141
    %v2557 = vunpack.c.h.b16 %v2141
    %v2558 = vunpack.c.l.b16 %v2142
    %v2559 = vunpack.c.h.b16 %v2142
    %v2560 = vunpack.c.l.b16 %v2143
    %v2561 = vunpack.c.h.b16 %v2143
    %v2562 = vunpack.c.l.b16 %v2144
    %v2563 = vunpack.c.h.b16 %v2144
    %v2564 = vunpack.c.l.b16 %v2145
    %v2565 = vunpack.c.h.b16 %v2145
    %v2566 = vunpack.c.l.b16 %v2146
    %v2567 = vunpack.c.h.b16 %v2146
    %v2568 = vunpack.c.l.b16 %v2147
    %v2569 = vunpack.c.h.b16 %v2147
    %v2570 = vunpack.c.l.b16 %v2148
    %v2571 = vunpack.c.h.b16 %v2148
    %v2572 = vunpack.c.l.b16 %v2149
    %v2573 = vunpack.c.h.b16 %v2149
    %v2574 = vunpack.c.l.b16 %v2150
    %v2575 = vunpack.c.h.b16 %v2150
    %v2576 = vunpack.c.l.b16 %v2151
    %v2577 = vunpack.c.h.b16 %v2151
    %v2578 = vunpack.c.l.b16 %v2152
    %v2579 = vunpack.c.h.b16 %v2152
    %v2580 = vunpack.c.l.b16 %v2153
    %v2581 = vunpack.c.h.b16 %v2153
    %v2582 = vunpack.c.l.b16 %v2154
    %v2583 = vunpack.c.h.b16 %v2154
    %v2584 = vunpack.c.l.b16 %v2155
    %v2585 = vunpack.c.h.b16 %v2155
    %v2586 = vunpack.c.l.b16 %v2156
    %v2587 = vunpack.c.h.b16 %v2156
    %v2588 = vunpack.c.l.b16 %v2157
    %v2589 = vunpack.c.h.b16 %v2157
    %v2590 = vunpack.c.l.b16 %v2158
    %v2591 = vunpack.c.h.b16 %v2158
    %v2592 = vunpack.c.l.b16 %v2159
    %v2593 = vunpack.c.h.b16 %v2159
    %v2594 = vunpack.c.l.b16 %v2160
    %v2595 = vunpack.c.h.b16 %v2160
    %v2596 = vunpack.c.l.b16 %v2161
    %v2597 = vunpack.c.h.b16 %v2161
    %v2598 = vunpack.c.l.b16 %v2162
    %v2599 = vunpack.c.h.b16 %v2162
    %v2600 = vunpack.c.l.b16 %v2163
    %v2601 = vunpack.c.h.b16 %v2163
    %v2602 = vunpack.c.l.b16 %v2164
    %v2603 = vunpack.c.h.b16 %v2164
    %v2604 = vunpack.c.l.b16 %v2165
    %v2605 = vunpack.c.h.b16 %v2165
    %v2606 = vunpack.c.l.b16 %v2166
    %v2607 = vunpack.c.h.b16 %v2166
    %v2608 = vunpack.c.l.b16 %v2167
    %v2609 = vunpack.c.h.b16 %v2167
    %v2610 = vunpack.c.l.b16 %v2168
    %v2611 = vunpack.c.h.b16 %v2168
    %v2612 = vunpack.c.l.b16 %v2169
    %v2613 = vunpack.c.h.b16 %v2169
    %v2614 = vunpack.c.l.b16 %v2170
    %v2615 = vunpack.c.h.b16 %v2170
    %v2616 = vunpack.c.l.b16 %v2171
    %v2617 = vunpack.c.h.b16 %v2171
    %v2618 = vunpack.c.l.b16 %v2172
    %v2619 = vunpack.c.h.b16 %v2172
    %v2620 = vunpack.c.l.b16 %v2173
    %v2621 = vunpack.c.h.b16 %v2173
    %v2622 = vunpack.c.l.b16 %v2174
    %v2623 = vunpack.c.h.b16 %v2174
    %v2624 = vunpack.c.l.b16 %v2175
    %v2625 = vunpack.c.h.b16 %v2175
    %v2626 = vunpack.c.l.b16 %v2176
    %v2627 = vunpack.c.h.b16 %v2176
    %v2628 = vunpack.c.l.b16 %v2177
    %v2629 = vunpack.c.h.b16 %v2177
    %v2630 = vunpack.c.l.b16 %v2178
    %v2631 = vunpack.c.h.b16 %v2178
    %v2632 = vunpack.c.l.b16 %v2179
    %v2633 = vunpack.c.h.b16 %v2179
    %v2634 = vunpack.c.l.b16 %v2180
    %v2635 = vunpack.c.h.b16 %v2180
    %v2636 = vunpack.c.l.b16 %v2181
    %v2637 = vunpack.c.h.b16 %v2181
    %v2638 = vunpack.c.l.b16 %v2182
    %v2639 = vunpack.c.h.b16 %v2182
    %v2640 = vunpack.c.l.b16 %v2183
    %v2641 = vunpack.c.h.b16 %v2183
    %v2642 = vunpack.c.l.b16 %v2184
    %v2643 = vunpack.c.h.b16 %v2184
    %v2644 = vunpack.c.l.b16 %v2185
    %v2645 = vunpack.c.h.b16 %v2185
    %v2646 = vunpack.c.l.b16 %v2186
    %v2647 = vunpack.c.h.b16 %v2186
    %v2648 = vunpack.c.l.b16 %v2187
    %v2649 = vunpack.c.h.b16 %v2187
    %v2650 = vunpack.c.l.b16 %v2188
    %v2651 = vunpack.c.h.b16 %v2188
    %v2652 = vunpack.c.l.b16 %v2189
    %v2653 = vunpack.c.h.b16 %v2189
    %v2654 = vunpack.c.l.b16 %v2190
    %v2655 = vunpack.c.h.b16 %v2190
    %v2656 = vunpack.c.l.b16 %v2191
    %v2657 = vunpack.c.h.b16 %v2191
    %v2658 = vunpack.c.l.b16 %v2192
    %v2659 = vunpack.c.h.b16 %v2192
    %v2660 = vunpack.c.l.b16 %v2193
    %v2661 = vunpack.c.h.b16 %v2193
    %v2662 = vunpack.c.l.b16 %v2194
    %v2663 = vunpack.c.h.b16 %v2194
    %v2664 = vunpack.c.l.b16 %v2195
    %v2665 = vunpack.c.h.b16 %v2195
    %v2666 = vunpack.c.l.b16 %v2196
    %v2667 = vunpack.c.h.b16 %v2196
    %v2668 = vunpack.c.l.b16 %v2197
    %v2669 = vunpack.c.h.b16 %v2197
    %v2670 = vunpack.c.l.b16 %v2198
    %v2671 = vunpack.c.h.b16 %v2198
    %v2672 = vunpack.c.l.b16 %v2199
    %v2673 = vunpack.c.h.b16 %v2199
    %v2674 = vunpack.c.l.b16 %v2200
    %v2675 = vunpack.c.h.b16 %v2200
    %v2676 = vunpack.c.l.b16 %v2201
    %v2677 = vunpack.c.h.b16 %v2201
    %v2678 = vunpack.c.l.b16 %v2202
    %v2679 = vunpack.c.h.b16 %v2202
    %v2680 = vunpack.c.l.b16 %v2203
    %v2681 = vunpack.c.h.b16 %v2203
    %v2682 = vunpack.c.l.b16 %v2204
    %v2683 = vunpack.c.h.b16 %v2204
    %v2684 = vunpack.c.l.b16 %v2205
    %v2685 = vunpack.c.h.b16 %v2205
    %v2686 = vunpack.c.l.b16 %v2206
    %v2687 = vunpack.c.h.b16 %v2206
    %v2688 = vunpack.c.l.b16 %v2207
    %v2689 = vunpack.c.h.b16 %v2207
    %v2690 = vunpack.c.l.b16 %v2208
    %v2691 = vunpack.c.h.b16 %v2208
    %v2692 = vunpack.c.l.b16 %v2209
    %v2693 = vunpack.c.h.b16 %v2209
    %v2694 = vunpack.c.l.b16 %v2210
    %v2695 = vunpack.c.h.b16 %v2210
    %v2696 = vunpack.c.l.b16 %v2211
    %v2697 = vunpack.c.h.b16 %v2211
    %v2698 = vunpack.c.l.b16 %v2212
    %v2699 = vunpack.c.h.b16 %v2212
    %v2700 = vunpack.c.l.b16 %v2213
    %v2701 = vunpack.c.h.b16 %v2213
    %v2702 = vunpack.c.l.b16 %v2214
    %v2703 = vunpack.c.h.b16 %v2214
    %v2704 = vunpack.c.l.b16 %v2215
    %v2705 = vunpack.c.h.b16 %v2215
    %v2706 = vunpack.c.l.b16 %v2216
    %v2707 = vunpack.c.h.b16 %v2216
    %v2708 = vunpack.c.l.b16 %v2217
    %v2709 = vunpack.c.h.b16 %v2217
    %v2710 = vunpack.c.l.b16 %v2218
    %v2711 = vunpack.c.h.b16 %v2218
    %v2712 = vunpack.c.l.b16 %v2219
    %v2713 = vunpack.c.h.b16 %v2219
    %v2714 = vunpack.c.l.b16 %v2220
    %v2715 = vunpack.c.h.b16 %v2220
    %v2716 = vunpack.c.l.b16 %v2221
    %v2717 = vunpack.c.h.b16 %v2221
    %v2718 = vunpack.c.l.b16 %v2222
    %v2719 = vunpack.c.h.b16 %v2222
    %v2720 = vunpack.c.l.b16 %v2223
    %v2721 = vunpack.c.h.b16 %v2223
    %v2722 = vunpack.c.l.b16 %v2224
    %v2723 = vunpack.c.h.b16 %v2224
    %v2724 = vunpack.c.l.b16 %v2225
    %v2725 = vunpack.c.h.b16 %v2225
    %v2726 = vunpack.c.l.b16 %v2226
    %v2727 = vunpack.c.h.b16 %v2226
    %v2728 = vunpack.c.l.b16 %v2227
    %v2729 = vunpack.c.h.b16 %v2227
    %v2730 = vpack.c.b16 %v2414, %v2410
    %v2731 = vpack.c.b16 %v2415, %v2411
    %v2732 = vpack.c.b16 %v2416, %v2412
    %v2733 = vpack.c.b16 %v2417, %v2413
    %v2734 = vpack.c.b16 %v2422, %v2418
    %v2735 = vpack.c.b16 %v2423, %v2419
    %v2736 = vpack.c.b16 %v2424, %v2420
    %v2737 = vpack.c.b16 %v2425, %v2421
    %v2738 = vpack.c.b16 %v2430, %v2426
    %v2739 = vpack.c.b16 %v2431, %v2427
    %v2740 = vpack.c.b16 %v2432, %v2428
    %v2741 = vpack.c.b16 %v2433, %v2429
    %v2742 = vpack.c.b16 %v2438, %v2434
    %v2743 = vpack.c.b16 %v2439, %v2435
    %v2744 = vpack.c.b16 %v2440, %v2436
    %v2745 = vpack.c.b16 %v2441, %v2437
    %v2746 = vpack.c.b16 %v2446, %v2442
    %v2747 = vpack.c.b16 %v2447, %v2443
    %v2748 = vpack.c.b16 %v2448, %v2444
    %v2749 = vpack.c.b16 %v2449, %v2445
    %v2750 = vpack.c.b16 %v2454, %v2450
    %v2751 = vpack.c.b16 %v2455, %v2451
    %v2752 = vpack.c.b16 %v2456, %v2452
    %v2753 = vpack.c.b16 %v2457, %v2453
    %v2754 = vpack.c.b16 %v2462, %v2458
    %v2755 = vpack.c.b16 %v2463, %v2459
    %v2756 = vpack.c.b16 %v2464, %v2460
    %v2757 = vpack.c.b16 %v2465, %v2461
    %v2758 = vpack.c.b16 %v2470, %v2466
    %v2759 = vpack.c.b16 %v2471, %v2467
    %v2760 = vpack.c.b16 %v2472, %v2468
    %v2761 = vpack.c.b16 %v2473, %v2469
    %v2762 = vpack.c.b16 %v2478, %v2474
    %v2763 = vpack.c.b16 %v2479, %v2475
    %v2764 = vpack.c.b16 %v2480, %v2476
    %v2765 = vpack.c.b16 %v2481, %v2477
    %v2766 = vpack.c.b16 %v2486, %v2482
    %v2767 = vpack.c.b16 %v2487, %v2483
    %v2768 = vpack.c.b16 %v2488, %v2484
    %v2769 = vpack.c.b16 %v2489, %v2485
    %v2770 = vpack.c.b16 %v2494, %v2490
    %v2771 = vpack.c.b16 %v2495, %v2491
    %v2772 = vpack.c.b16 %v2496, %v2492
    %v2773 = vpack.c.b16 %v2497, %v2493
    %v2774 = vpack.c.b16 %v2502, %v2498
    %v2775 = vpack.c.b16 %v2503, %v2499
    %v2776 = vpack.c.b16 %v2504, %v2500
    %v2777 = vpack.c.b16 %v2505, %v2501
    %v2778 = vpack.c.b16 %v2510, %v2506
    %v2779 = vpack.c.b16 %v2511, %v2507
    %v2780 = vpack.c.b16 %v2512, %v2508
    %v2781 = vpack.c.b16 %v2513, %v2509
    %v2782 = vpack.c.b16 %v2518, %v2514
    %v2783 = vpack.c.b16 %v2519, %v2515
    %v2784 = vpack.c.b16 %v2520, %v2516
    %v2785 = vpack.c.b16 %v2521, %v2517
    %v2786 = vpack.c.b16 %v2526, %v2522
    %v2787 = vpack.c.b16 %v2527, %v2523
    %v2788 = vpack.c.b16 %v2528, %v2524
    %v2789 = vpack.c.b16 %v2529, %v2525
    %v2790 = vpack.c.b16 %v2534, %v2530
    %v2791 = vpack.c.b16 %v2535, %v2531
    %v2792 = vpack.c.b16 %v2536, %v2532
    %v2793 = vpack.c.b16 %v2537, %v2533
    %v2794 = vpack.c.b16 %v2542, %v2538
    %v2795 = vpack.c.b16 %v2543, %v2539
    %v2796 = vpack.c.b16 %v2544, %v2540
    %v2797 = vpack.c.b16 %v2545, %v2541
    %v2798 = vpack.c.b16 %v2550, %v2546
    %v2799 = vpack.c.b16 %v2551, %v2547
    %v2800 = vpack.c.b16 %v2552, %v2548
    %v2801 = vpack.c.b16 %v2553, %v2549
    %v2802 = vpack.c.b16 %v2558, %v2554
    %v2803 = vpack.c.b16 %v2559, %v2555
    %v2804 = vpack.c.b16 %v2560, %v2556
    %v2805 = vpack.c.b16 %v2561, %v2557
    %v2806 = vpack.c.b16 %v2566, %v2562
    %v2807 = vpack.c.b16 %v2567, %v2563
    %v2808 = vpack.c.b16 %v2568, %v2564
    %v2809 = vpack.c.b16 %v2569, %v2565
    %v2810 = vpack.c.b16 %v2574, %v2570
    %v2811 = vpack.c.b16 %v2575, %v2571
    %v2812 = vpack.c.b16 %v2576, %v2572
    %v2813 = vpack.c.b16 %v2577, %v2573
    %v2814 = vpack.c.b16 %v2582, %v2578
    %v2815 = vpack.c.b16 %v2583, %v2579
    %v2816 = vpack.c.b16 %v2584, %v2580
    %v2817 = vpack.c.b16 %v2585, %v2581
    %v2818 = vpack.c.b16 %v2590, %v2586
    %v2819 = vpack.c.b16 %v2591, %v2587
    %v2820 = vpack.c.b16 %v2592, %v2588
    %v2821 = vpack.c.b16 %v2593, %v2589
    %v2822 = vpack.c.b16 %v2598, %v2594
    %v2823 = vpack.c.b16 %v2599, %v2595
    %v2824 = vpack.c.b16 %v2600, %v2596
    %v2825 = vpack.c.b16 %v2601, %v2597
    %v2826 = vpack.c.b16 %v2606, %v2602
    %v2827 = vpack.c.b16 %v2607, %v2603
    %v2828 = vpack.c.b16 %v2608, %v2604
    %v2829 = vpack.c.b16 %v2609, %v2605
    %v2830 = vpack.c.b16 %v2614, %v2610
    %v2831 = vpack.c.b16 %v2615, %v2611
    %v2832 = vpack.c.b16 %v2616, %v2612
    %v2833 = vpack.c.b16 %v2617, %v2613
    %v2834 = vpack.c.b16 %v2622, %v2618
    %v2835 = vpack.c.b16 %v2623, %v2619
    %v2836 = vpack.c.b16 %v2624, %v2620
    %v2837 = vpack.c.b16 %v2625, %v2621
    %v2838 = vpack.c.b16 %v2630, %v2626
    %v2839 = vpack.c.b16 %v2631, %v2627
    %v2840 = vpack.c.b16 %v2632, %v2628
    %v2841 = vpack.c.b16 %v2633, %v2629
    %v2842 = vpack.c.b16 %v2638, %v2634
    %v2843 = vpack.c.b16 %v2639, %v2635
    %v2844 = vpack.c.b16 %v2640, %v2636
    %v2845 = vpack.c.b16 %v2641, %v2637
    %v2846 = vpack.c.b16 %v2646, %v2642
    %v2847 = vpack.c.b16 %v2647, %v2643
    %v2848 = vpack.c.b16 %v2648, %v2644
    %v2849 = vpack.c.b16 %v2649, %v2645
    %v2850 = vpack.c.b16 %v2654, %v2650
    %v2851 = vpack.c.b16 %v2655, %v2651
    %v2852 = vpack.c.b16 %v2656, %v2652
    %v2853 = vpack.c.b16 %v2657, %v2653
    %v2854 = vpack.c.b16 %v2662, %v2658
    %v2855 = vpack.c.b16 %v2663, %v2659
    %v2856 = vpack.c.b16 %v2664, %v2660
    %v2857 = vpack.c.b16 %v2665, %v2661
    %v2858 = vpack.c.b16 %v2670, %v2666
    %v2859 = vpack.c.b16 %v2671, %v2667
    %v2860 = vpack.c.b16 %v2672, %v2668
    %v2861 = vpack.c.b16 %v2673, %v2669
    %v2862 = vpack.c.b16 %v2678, %v2674
    %v2863 = vpack.c.b16 %v2679, %v2675
    %v2864 = vpack.c.b16 %v2680, %v2676
    %v2865 = vpack.c.b16 %v2681, %v2677
    %v2866 = vpack.c.b16 %v2686, %v2682
    %v2867 = vpack.c.b16 %v2687, %v2683
    %v2868 = vpack.c.b16 %v2688, %v2684
    %v2869 = vpack.c.b16 %v2689, %v2685
    %v2870 = vpack.c.b16 %v2694, %v2690
    %v2871 = vpack.c.b16 %v2695, %v2691
    %v2872 = vpack.c.b16 %v2696, %v2692
    %v2873 = vpack.c.b16 %v2697, %v2693
    %v2874 = vpack.c.b16 %v2702, %v2698
    %v2875 = vpack.c.b16 %v2703, %v2699
    %v2876 = vpack.c.b16 %v2704, %v2700
    %v2877 = vpack.c.b16 %v2705, %v2701
    %v2878 = vpack.c.b16 %v2710, %v2706
    %v2879 = vpack.c.b16 %v2711, %v2707
    %v2880 = vpack.c.b16 %v2712, %v2708
    %v2881 = vpack.c.b16 %v2713, %v2709
    %v2882 = vpack.c.b16 %v2718, %v2714
    %v2883 = vpack.c.b16 %v2719, %v2715
    %v2884 = vpack.c.b16 %v2720, %v2716
    %v2885 = vpack.c.b16 %v2721, %v2717
    %v2886 = vpack.c.b16 %v2726, %v2722
    %v2887 = vpack.c.b16 %v2727, %v2723
    %v2888 = vpack.c.b16 %v2728, %v2724
    %v2889 = vpack.c.b16 %v2729, %v2725
    %3050 = vmatprep.subr.bf16.mxu0 %v2759
    %3051 = vmatpush1.bf16.msra.mxu0 %v2758
    %3052 = vmatprep.subr.bf16.mxu0 %v2755
    %3053 = vmatpush1.bf16.msra.mxu0 %v2754
    %3054 = vmatprep.subr.bf16.mxu0 %v2751
    %3055 = vmatpush1.bf16.msra.mxu0 %v2750
    %3056 = vmatprep.subr.bf16.mxu0 %v2747
    %3057 = vmatpush1.bf16.msra.mxu0 %v2746
    %3058 = vmatprep.subr.bf16.mxu0 %v2743
    %3059 = vmatpush1.bf16.msra.mxu0 %v2742
    %3060 = vmatprep.subr.bf16.mxu0 %v2739
    %3061 = vmatpush1.bf16.msra.mxu0 %v2738
    %3062 = vmatprep.subr.bf16.mxu0 %v2735
    %3063 = vmatpush1.bf16.msra.mxu0 %v2734
    %3064 = vmatprep.subr.bf16.mxu0 %v2731
    %3065 = vmatpush1.bf16.msra.mxu0 %v2730
    %3066 = vmatprep.subr.bf16.mxu0 %v2791
    %3067 = vmatpush2.bf16.msra.mxu0 %v2790
    %3068 = vmatprep.subr.bf16.mxu0 %v2787
    %3069 = vmatpush2.bf16.msra.mxu0 %v2786
    %3070 = vmatprep.subr.bf16.mxu0 %v2783
    %3071 = vmatpush2.bf16.msra.mxu0 %v2782
    %3072 = vmatprep.subr.bf16.mxu0 %v2779
    %3073 = vmatpush2.bf16.msra.mxu0 %v2778
    %3074 = vmatprep.subr.bf16.mxu0 %v2775
    %3075 = vmatpush2.bf16.msra.mxu0 %v2774
    %3076 = vmatprep.subr.bf16.mxu0 %v2771
    %3077 = vmatpush2.bf16.msra.mxu0 %v2770
    %3078 = vmatprep.subr.bf16.mxu0 %v2767
    %3079 = vmatpush2.bf16.msra.mxu0 %v2766
    %3080 = vmatprep.subr.bf16.mxu0 %v2763
    %3081 = vmatpush2.bf16.msra.mxu0 %v2762
    %3082 = vmatprep.mubr.bf16.mxu0 %v2064
    %3083 = vmatmul.mubr.bf16.gmra.mxu0 %v2063
    %v3084 = vpop.f32.mrf.mxu0
    %v3085 = vadd.f32 %v2233, %v3084
    %v3086 = vpop.f32.mrf.mxu0
    %v3087 = vadd.f32 %v2237, %v3086
    %v3088 = vpop.f32.mrf.mxu0
    %v3089 = vpop.f32.mrf.mxu0
    %3090 = vdwg.mxu0
    %3091 = vmatprep.subr.bf16.mxu0 %v2823
    %3092 = vmatpush1.bf16.msra.mxu0 %v2822
    %3093 = vmatprep.subr.bf16.mxu0 %v2819
    %3094 = vmatpush1.bf16.msra.mxu0 %v2818
    %3095 = vmatprep.subr.bf16.mxu0 %v2815
    %3096 = vmatpush1.bf16.msra.mxu0 %v2814
    %3097 = vmatprep.subr.bf16.mxu0 %v2811
    %3098 = vmatpush1.bf16.msra.mxu0 %v2810
    %3099 = vmatprep.subr.bf16.mxu0 %v2807
    %3100 = vmatpush1.bf16.msra.mxu0 %v2806
    %3101 = vmatprep.subr.bf16.mxu0 %v2803
    %3102 = vmatpush1.bf16.msra.mxu0 %v2802
    %3103 = vmatprep.subr.bf16.mxu0 %v2799
    %3104 = vmatpush1.bf16.msra.mxu0 %v2798
    %3105 = vmatprep.subr.bf16.mxu0 %v2795
    %3106 = vmatpush1.bf16.msra.mxu0 %v2794
    %3107 = vmatprep.subr.bf16.mxu0 %v2855
    %3108 = vmatpush2.bf16.msra.mxu0 %v2854
    %3109 = vmatprep.subr.bf16.mxu0 %v2851
    %3110 = vmatpush2.bf16.msra.mxu0 %v2850
    %3111 = vmatprep.subr.bf16.mxu0 %v2847
    %3112 = vmatpush2.bf16.msra.mxu0 %v2846
    %3113 = vmatprep.subr.bf16.mxu0 %v2843
    %3114 = vmatpush2.bf16.msra.mxu0 %v2842
    %3115 = vmatprep.subr.bf16.mxu0 %v2839
    %3116 = vmatpush2.bf16.msra.mxu0 %v2838
    %3117 = vmatprep.subr.bf16.mxu0 %v2835
    %3118 = vmatpush2.bf16.msra.mxu0 %v2834
    %3119 = vmatprep.subr.bf16.mxu0 %v2831
    %3120 = vmatpush2.bf16.msra.mxu0 %v2830
    %3121 = vmatprep.subr.bf16.mxu0 %v2827
    %3122 = vmatpush2.bf16.msra.mxu0 %v2826
    %3123 = vmatprep.mubr.bf16.mxu0 %v2066
    %3124 = vmatmul.mubr.bf16.gmra.mxu0 %v2065
    %v3125 = vpop.f32.mrf.mxu0
    %v3126 = vadd.f32 %v3085, %v3125
    %v3127 = vpop.f32.mrf.mxu0
    %v3128 = vadd.f32 %v3087, %v3127
    %v3129 = vpop.f32.mrf.mxu0
    %v3130 = vpop.f32.mrf.mxu0
    %3131 = vdwg.mxu0
    %3132 = vmatprep.subr.bf16.mxu0 %v2887
    %3133 = vmatpush1.bf16.msra.mxu0 %v2886
    %3134 = vmatprep.subr.bf16.mxu0 %v2883
    %3135 = vmatpush1.bf16.msra.mxu0 %v2882
    %3136 = vmatprep.subr.bf16.mxu0 %v2879
    %3137 = vmatpush1.bf16.msra.mxu0 %v2878
    %3138 = vmatprep.subr.bf16.mxu0 %v2875
    %3139 = vmatpush1.bf16.msra.mxu0 %v2874
    %3140 = vmatprep.subr.bf16.mxu0 %v2871
    %3141 = vmatpush1.bf16.msra.mxu0 %v2870
    %3142 = vmatprep.subr.bf16.mxu0 %v2867
    %3143 = vmatpush1.bf16.msra.mxu0 %v2866
    %3144 = vmatprep.subr.bf16.mxu0 %v2863
    %3145 = vmatpush1.bf16.msra.mxu0 %v2862
    %3146 = vmatprep.subr.bf16.mxu0 %v2859
    %3147 = vmatpush1.bf16.msra.mxu0 %v2858
    %3148 = vmatprep.subr.bf16.mxu0 0
    %3149 = vmatpush2.bf16.msra.mxu0 0
    %3150 = vmatprep.subr.bf16.mxu0 0
    %3151 = vmatpush2.bf16.msra.mxu0 0
    %3152 = vmatprep.subr.bf16.mxu0 0
    %3153 = vmatpush2.bf16.msra.mxu0 0
    %3154 = vmatprep.subr.bf16.mxu0 0
    %3155 = vmatpush2.bf16.msra.mxu0 0
    %3156 = vmatprep.subr.bf16.mxu0 0
    %3157 = vmatpush2.bf16.msra.mxu0 0
    %3158 = vmatprep.subr.bf16.mxu0 0
    %3159 = vmatpush2.bf16.msra.mxu0 0
    %3160 = vmatprep.subr.bf16.mxu0 0
    %3161 = vmatpush2.bf16.msra.mxu0 0
    %3162 = vmatprep.subr.bf16.mxu0 0
    %3163 = vmatpush2.bf16.msra.mxu0 0
    %3164 = vmatprep.mubr.bf16.mxu0 0
    %3165 = vmatmul.mubr.bf16.gmra.mxu0 %v2067
    %v3166 = vpop.f32.mrf.mxu0
    %v3167 = vadd.f32 %v3126, %v3166
    %v3168 = vpop.f32.mrf.mxu0
    %v3169 = vadd.f32 %v3128, %v3168
    %v3170 = vpop.f32.mrf.mxu0
    %v3171 = vpop.f32.mrf.mxu0
    %3172 = vdwg.mxu0
    %3173 = vmatprep.subr.bf16.mxu0 %v2761
    %3174 = vmatpush1.bf16.msra.mxu0 %v2760
    %3175 = vmatprep.subr.bf16.mxu0 %v2757
    %3176 = vmatpush1.bf16.msra.mxu0 %v2756
    %3177 = vmatprep.subr.bf16.mxu0 %v2753
    %3178 = vmatpush1.bf16.msra.mxu0 %v2752
    %3179 = vmatprep.subr.bf16.mxu0 %v2749
    %3180 = vmatpush1.bf16.msra.mxu0 %v2748
    %3181 = vmatprep.subr.bf16.mxu0 %v2745
    %3182 = vmatpush1.bf16.msra.mxu0 %v2744
    %3183 = vmatprep.subr.bf16.mxu0 %v2741
    %3184 = vmatpush1.bf16.msra.mxu0 %v2740
    %3185 = vmatprep.subr.bf16.mxu0 %v2737
    %3186 = vmatpush1.bf16.msra.mxu0 %v2736
    %3187 = vmatprep.subr.bf16.mxu0 %v2733
    %3188 = vmatpush1.bf16.msra.mxu0 %v2732
    %3189 = vmatprep.subr.bf16.mxu0 %v2793
    %3190 = vmatpush2.bf16.msra.mxu0 %v2792
    %3191 = vmatprep.subr.bf16.mxu0 %v2789
    %3192 = vmatpush2.bf16.msra.mxu0 %v2788
    %3193 = vmatprep.subr.bf16.mxu0 %v2785
    %3194 = vmatpush2.bf16.msra.mxu0 %v2784
    %3195 = vmatprep.subr.bf16.mxu0 %v2781
    %3196 = vmatpush2.bf16.msra.mxu0 %v2780
    %3197 = vmatprep.subr.bf16.mxu0 %v2777
    %3198 = vmatpush2.bf16.msra.mxu0 %v2776
    %3199 = vmatprep.subr.bf16.mxu0 %v2773
    %3200 = vmatpush2.bf16.msra.mxu0 %v2772
    %3201 = vmatprep.subr.bf16.mxu0 %v2769
    %3202 = vmatpush2.bf16.msra.mxu0 %v2768
    %3203 = vmatprep.subr.bf16.mxu0 %v2765
    %3204 = vmatpush2.bf16.msra.mxu0 %v2764
    %3205 = vmatprep.mubr.bf16.mxu0 %v2064
    %3206 = vmatmul.mubr.bf16.gmra.mxu0 %v2063
    %v3207 = vpop.f32.mrf.mxu0
    %v3208 = vadd.f32 %v2241, %v3207
    %v3209 = vpop.f32.mrf.mxu0
    %v3210 = vadd.f32 %v2245, %v3209
    %v3211 = vpop.f32.mrf.mxu0
    %v3212 = vpop.f32.mrf.mxu0
    %3213 = vdwg.mxu0
    %3214 = vmatprep.subr.bf16.mxu0 %v2825
    %3215 = vmatpush1.bf16.msra.mxu0 %v2824
    %3216 = vmatprep.subr.bf16.mxu0 %v2821
    %3217 = vmatpush1.bf16.msra.mxu0 %v2820
    %3218 = vmatprep.subr.bf16.mxu0 %v2817
    %3219 = vmatpush1.bf16.msra.mxu0 %v2816
    %3220 = vmatprep.subr.bf16.mxu0 %v2813
    %3221 = vmatpush1.bf16.msra.mxu0 %v2812
    %3222 = vmatprep.subr.bf16.mxu0 %v2809
    %3223 = vmatpush1.bf16.msra.mxu0 %v2808
    %3224 = vmatprep.subr.bf16.mxu0 %v2805
    %3225 = vmatpush1.bf16.msra.mxu0 %v2804
    %3226 = vmatprep.subr.bf16.mxu0 %v2801
    %3227 = vmatpush1.bf16.msra.mxu0 %v2800
    %3228 = vmatprep.subr.bf16.mxu0 %v2797
    %3229 = vmatpush1.bf16.msra.mxu0 %v2796
    %3230 = vmatprep.subr.bf16.mxu0 %v2857
    %3231 = vmatpush2.bf16.msra.mxu0 %v2856
    %3232 = vmatprep.subr.bf16.mxu0 %v2853
    %3233 = vmatpush2.bf16.msra.mxu0 %v2852
    %3234 = vmatprep.subr.bf16.mxu0 %v2849
    %3235 = vmatpush2.bf16.msra.mxu0 %v2848
    %3236 = vmatprep.subr.bf16.mxu0 %v2845
    %3237 = vmatpush2.bf16.msra.mxu0 %v2844
    %3238 = vmatprep.subr.bf16.mxu0 %v2841
    %3239 = vmatpush2.bf16.msra.mxu0 %v2840
    %3240 = vmatprep.subr.bf16.mxu0 %v2837
    %3241 = vmatpush2.bf16.msra.mxu0 %v2836
    %3242 = vmatprep.subr.bf16.mxu0 %v2833
    %3243 = vmatpush2.bf16.msra.mxu0 %v2832
    %3244 = vmatprep.subr.bf16.mxu0 %v2829
    %3245 = vmatpush2.bf16.msra.mxu0 %v2828
    %3246 = vmatprep.mubr.bf16.mxu0 %v2066
    %3247 = vmatmul.mubr.bf16.gmra.mxu0 %v2065
    %v3248 = vpop.f32.mrf.mxu0
    %v3249 = vadd.f32 %v3208, %v3248
    %v3250 = vpop.f32.mrf.mxu0
    %v3251 = vadd.f32 %v3210, %v3250
    %v3252 = vpop.f32.mrf.mxu0
    %v3253 = vpop.f32.mrf.mxu0
    %3254 = vdwg.mxu0
    %3255 = vmatprep.subr.bf16.mxu0 %v2889
    %3256 = vmatpush1.bf16.msra.mxu0 %v2888
    %3257 = vmatprep.subr.bf16.mxu0 %v2885
    %3258 = vmatpush1.bf16.msra.mxu0 %v2884
    %3259 = vmatprep.subr.bf16.mxu0 %v2881
    %3260 = vmatpush1.bf16.msra.mxu0 %v2880
    %3261 = vmatprep.subr.bf16.mxu0 %v2877
    %3262 = vmatpush1.bf16.msra.mxu0 %v2876
    %3263 = vmatprep.subr.bf16.mxu0 %v2873
    %3264 = vmatpush1.bf16.msra.mxu0 %v2872
    %3265 = vmatprep.subr.bf16.mxu0 %v2869
    %3266 = vmatpush1.bf16.msra.mxu0 %v2868
    %3267 = vmatprep.subr.bf16.mxu0 %v2865
    %3268 = vmatpush1.bf16.msra.mxu0 %v2864
    %3269 = vmatprep.subr.bf16.mxu0 %v2861
    %3270 = vmatpush1.bf16.msra.mxu0 %v2860
    %3271 = vmatprep.subr.bf16.mxu0 0
    %3272 = vmatpush2.bf16.msra.mxu0 0
    %3273 = vmatprep.subr.bf16.mxu0 0
    %3274 = vmatpush2.bf16.msra.mxu0 0
    %3275 = vmatprep.subr.bf16.mxu0 0
    %3276 = vmatpush2.bf16.msra.mxu0 0
    %3277 = vmatprep.subr.bf16.mxu0 0
    %3278 = vmatpush2.bf16.msra.mxu0 0
    %3279 = vmatprep.subr.bf16.mxu0 0
    %3280 = vmatpush2.bf16.msra.mxu0 0
    %3281 = vmatprep.subr.bf16.mxu0 0
    %3282 = vmatpush2.bf16.msra.mxu0 0
    %3283 = vmatprep.subr.bf16.mxu0 0
    %3284 = vmatpush2.bf16.msra.mxu0 0
    %3285 = vmatprep.subr.bf16.mxu0 0
    %3286 = vmatpush2.bf16.msra.mxu0 0
    %3287 = vmatprep.mubr.bf16.mxu0 0
    %3288 = vmatmul.mubr.bf16.gmra.mxu0 %v2067
    %v3289 = vpop.f32.mrf.mxu0
    %v3290 = vadd.f32 %v3249, %v3289
    %v3291 = vpop.f32.mrf.mxu0
    %v3292 = vadd.f32 %v3251, %v3291
    %v3293 = vpop.f32.mrf.mxu0
    %v3294 = vpop.f32.mrf.mxu0
    %3295 = vdwg.mxu0
    %v3296 = vmax.f32 %v3167, 0.0
    %v3297 = vmax.f32 %v3169, 0.0
    %v3298 = vmax.f32 %v3290, 0.0
    %v3299 = vmax.f32 %v3292, 0.0
    %3300 = vst [vmem:[#allocation13] sm:$0xff] %v3296
    %3301 = vst [vmem:[#allocation13 + $0x8] sm:$0xff] %v3297
    %3302 = vst [vmem:[#allocation13 + $0x10] sm:$0xff] %v3298
    %3303 = vst [vmem:[#allocation13 + $0x18] sm:$0xff] %v3299
    // Predicated region
    $region62: #{tpu_custom_call.1} parent=1 // pred_check
      _
    $region63: #{tpu_custom_call.1} parent=1 // pred_check_branch
      %3305 = sbr.rel (0) target = $region65
    $region64: #{tpu_custom_call.1} parent=1 // pred_region
      %s3307 = ssub.s32 512, 512
      %3308 = vsyncadd [#allocation4], %s3307
      %s3310 = sshll.u32 [#allocation13], 4
      %s3311 = int_to_ptr.vmem [resolvable:$true] %s3310
      %3313 = dma.vmem_to_hbm [thread:$0]  %s3311, 512, %s9, [#allocation4]
    $region65: #{tpu_custom_call.1} parent=1 // pred_fallthru
      _
    // Predicated region
    $region66: #{tpu_custom_call.1} parent=1 // pred_check
      _
    $region67: #{tpu_custom_call.1} parent=1 // pred_check_branch
      %3315 = sbr.rel (0) target = $region69
    $region68: #{tpu_custom_call.1} parent=1 // pred_region
      %3316 = dma.done [#allocation4], 512
    $region69: #{tpu_custom_call.1} parent=1 // pred_fallthru
      _
    %3317 = vsyncpa [#allocation3], 1
    %3318 = vsyncpa [#allocation6], 1
    %3319 = vsyncpa [#allocation9], 1
    %3320 = vsyncpa [#allocation12], 1
    %3321 = vsyncpa [#allocation4], 1

</llo_original>
